<compile_context>
chip_gen: v7x
topology: tpu7x:2x2x1
jax: 0.10.0
libtpu: 0.0.40
codegen_flags: <defaults>
</compile_context>

<pallas_src>
import functools

import jax
import jax.numpy as jnp
from jax.experimental import pallas as pl
from jax.experimental.pallas import tpu as pltpu


def _pool_bias_kernel(x_ref, wab_ref, shab_ref, wlmax_ref, wlmean_ref, bl_ref,
                      wo_ref, sho_ref, o_ref, *, b_tile, cp):
    # Hoist weight/shift loads out of the per-image loop (loaded once per grid step).
    wab = wab_ref[...]          # (Cp, 2Cp)  bf16, BN scale folded in
    shab = shab_ref[...]        # (1, 2Cp)   f32 BN shift for [a | b]
    wlmax = wlmax_ref[...]      # (Cp, Cp)   bf16
    wlmean = wlmean_ref[...]    # (Cp, Cp)   bf16
    bl = bl_ref[...]            # (1, Cp)    f32 linear bias
    wo = wo_ref[...]            # (Cp, Cp)   bf16, BN scale folded in
    sho = sho_ref[...]          # (1, Cp)    f32 BN shift

    for i in range(b_tile):     # static unroll over the batch tile
        x = x_ref[i]            # (HW, Cp) bf16

        # fused conv1x1a | conv1x1b (single matmul, 2*Cp output lanes) + shift + relu
        ab = jnp.dot(x, wab, preferred_element_type=jnp.float32)
        ab = jnp.maximum(ab + shab, 0.0)                      # (HW, 2Cp) f32
        a = ab[:, :cp]                                        # (HW, Cp)
        b = ab[:, cp:]                                        # (HW, Cp)

        # global 9x9 max / avg pooling == reduction over the flattened spatial axis
        bmax = jnp.max(b, axis=0, keepdims=True)              # (1, Cp)
        bmean = jnp.mean(b, axis=0, keepdims=True)            # (1, Cp)

        # Linear on concat(bmax, bmean): split into two Cp x Cp matmuls
        bias_vec = (jnp.dot(bmax.astype(wlmax.dtype), wlmax,
                            preferred_element_type=jnp.float32)
                    + jnp.dot(bmean.astype(wlmean.dtype), wlmean,
                              preferred_element_type=jnp.float32)
                    + bl)                                      # (1, Cp)

        # c = a + b[:, :, None, None]  (broadcast over spatial positions)
        c = a + bias_vec                                       # (HW, Cp)

        # conv1x1out (matmul, BN scale folded) + BN shift
        out = jnp.dot(c.astype(wo.dtype), wo, preferred_element_type=jnp.float32)
        o_ref[i] = (out + sho).astype(o_ref.dtype)


def pool_bias_pallas(x_nchw, prepared, *, channels, padded_channels,
                     batch_tile=8, compute_dtype=jnp.bfloat16):
    N, C, H, W = x_nchw.shape
    assert C == channels and H == 9 and W == 9, "PoolBias assumes a 9x9 board"
    HW = H * W
    Cp = padded_channels
    assert Cp >= C and Cp % 128 == 0, "channels padded to a lane-dense multiple of 128"

    B = min(batch_tile, N)
    n_blocks = -(-N // B)
    N_pad = n_blocks * B

    # NCHW -> (N, HW, C); pad batch + channels; bf16 matmul operands.
    x = jnp.transpose(x_nchw, (0, 2, 3, 1)).reshape(N, HW, C)
    x = jnp.pad(x, ((0, N_pad - N), (0, 0), (0, Cp - C))).astype(compute_dtype)

    (wab, shab, wlmax, wlmean, bl, wo, sho) = prepared

    def rep(shape):
        return pl.BlockSpec(shape, lambda n: (0,) * len(shape))

    kernel = functools.partial(_pool_bias_kernel, b_tile=B, cp=Cp)

    flops = int(N_pad * (2 * HW * Cp * (2 * Cp)      # fused a|b conv
                         + 4 * Cp * Cp               # linear (two Cp x Cp, M=1)
                         + 2 * HW * Cp * Cp))        # conv1x1out
    bytes_accessed = int(
        x.size * 2 + N_pad * HW * Cp * 4
        + (wab.size + wlmax.size + wlmean.size + wo.size) * 2
        + (shab.size + bl.size + sho.size) * 4)

    out = pl.pallas_call(
        kernel,
        out_shape=jax.ShapeDtypeStruct((N_pad, HW, Cp), jnp.float32),
        grid=(n_blocks,),
        in_specs=[
            pl.BlockSpec((B, HW, Cp), lambda n: (n, 0, 0)),    # x (batch tile)
            rep((Cp, 2 * Cp)), rep((1, 2 * Cp)),               # fused conv a|b + shift
            rep((Cp, Cp)), rep((Cp, Cp)), rep((1, Cp)),        # linear (split) + bias
            rep((Cp, Cp)), rep((1, Cp)),                       # conv1x1out + shift
        ],
        out_specs=pl.BlockSpec((B, HW, Cp), lambda n: (n, 0, 0)),
        compiler_params=pltpu.CompilerParams(dimension_semantics=("parallel",)),
        cost_estimate=pl.CostEstimate(flops=flops, transcendentals=0,
                                      bytes_accessed=bytes_accessed),
    )(x, wab, shab, wlmax, wlmean, bl, wo, sho)

    # (N_pad, HW, Cp) -> NCHW, dropping batch/channel padding.
    out = out[:N, :, :C].reshape(N, H, W, C)
    return jnp.transpose(out, (0, 3, 1, 2))


def make_torch_like_params(key, channels):
    """Deterministic synthetic parameters matching PoolBias.__init__ shapes."""
    C = channels
    ks = jax.random.split(key, 16)

    def conv_bn(k0, k1, k2, k3, k4):
        w = jax.random.normal(k0, (C, C), jnp.float32) * 0.1     # conv1x1 [cout, cin]
        gamma = 1.0 + 0.1 * jax.random.normal(k1, (C,), jnp.float32)
        beta = 0.1 * jax.random.normal(k2, (C,), jnp.float32)
        rmean = 0.1 * jax.random.normal(k3, (C,), jnp.float32)
        rvar = jnp.abs(jax.random.normal(k4, (C,), jnp.float32)) + 0.5
        return dict(w=w, gamma=gamma, beta=beta, mean=rmean, var=rvar)

    pa = conv_bn(*ks[0:5])
    pb = conv_bn(*ks[5:10])
    po = conv_bn(*ks[10:15])
    wl = jax.random.normal(ks[15], (C, 2 * C), jnp.float32) * 0.1   # nn.Linear(2C, C)
    bl = 0.01 * jnp.arange(C, dtype=jnp.float32)
    return dict(a=pa, b=pb, o=po, wl=wl, bl=bl)


def prepare_params(raw, *, channels, padded_channels, eps=1e-3,
                   compute_dtype=jnp.bfloat16):
    """Fold BN scale into weights, fuse conv a|b, zero-pad channels, cast to bf16."""
    C, Cp = channels, padded_channels

    def fold(p):
        scale = p['gamma'] / jnp.sqrt(p['var'] + eps)
        shift = p['beta'] - p['mean'] * scale
        w = p['w'].T * scale[None, :]           # (Cin, Cout) with BN scale folded
        return w, shift

    wa, sha = fold(raw['a'])
    wb, shb = fold(raw['b'])
    wo, sho = fold(raw['o'])

    def pad_w(w):
        return jnp.pad(w, ((0, Cp - C), (0, Cp - C)))

    def pad_v(v):
        return jnp.pad(v, (0, Cp - C))

    wab = jnp.concatenate([pad_w(wa), pad_w(wb)], axis=1)          # (Cp, 2Cp)
    shab = jnp.concatenate([pad_v(sha), pad_v(shb)])[None, :]      # (1, 2Cp)
    wlmax = pad_w(raw['wl'][:, :C].T)                               # (Cp, Cp)
    wlmean = pad_w(raw['wl'][:, C:].T)                              # (Cp, Cp)
    bl = pad_v(raw['bl'])[None, :]                                  # (1, Cp)
    wo_p = pad_w(wo)
    sho_p = pad_v(sho)[None, :]

    cd = compute_dtype
    return (wab.astype(cd), shab, wlmax.astype(cd), wlmean.astype(cd), bl,
            wo_p.astype(cd), sho_p)


def pool_bias_reference(x_nchw, raw, eps=1e-3):
    """Plain-JAX f32 reference mirroring the PyTorch forward (eval-mode BN)."""
    N, C, H, W = x_nchw.shape
    x = jnp.transpose(x_nchw, (0, 2, 3, 1)).reshape(N, H * W, C)

    def conv_bn(t, p):
        scale = p['gamma'] / jnp.sqrt(p['var'] + eps)
        shift = p['beta'] - p['mean'] * scale
        return (t @ p['w'].T) * scale + shift

    a = jnp.maximum(conv_bn(x, raw['a']), 0.0)
    b = jnp.maximum(conv_bn(x, raw['b']), 0.0)
    bmax = jnp.max(b, axis=1)                                   # (N, C)
    bmean = jnp.mean(b, axis=1)                                 # (N, C)
    pooled = jnp.concatenate([bmax, bmean], axis=-1)            # (N, 2C)
    bias_vec = pooled @ raw['wl'].T + raw['bl']                 # (N, C)
    c = a + bias_vec[:, None, :]
    out = conv_bn(c, raw['o'])
    return jnp.transpose(out.reshape(N, H, W, C), (0, 3, 1, 2))


if __name__ == "__main__":
    N, C, H, W = 6, 32, 9, 9          # 9x9 board required by kernel_size=9 pooling
    Cp = 128                           # lane-dense padded channel count
    key = jax.random.PRNGKey(0)
    kx, kp = jax.random.split(key)
    x = jax.random.normal(kx, (N, C, H, W), jnp.float32)
    raw = make_torch_like_params(kp, C)
    prepared = prepare_params(raw, channels=C, padded_channels=Cp)

    out = jax.block_until_ready(
        pool_bias_pallas(x, prepared, channels=C, padded_channels=Cp, batch_tile=4))
    ref = jax.block_until_ready(pool_bias_reference(x, raw))

    assert out.shape == (N, C, H, W)
    err = float(jnp.max(jnp.abs(out - ref)))
    assert jnp.allclose(out, ref, rtol=3e-2, atol=3e-2), err
    print("KERNEL_OK")
</pallas_src>

<mosaic_0001>
module attributes {stable_mosaic.version = 11 : i64} {
  func.func @_pool_bias_kernel(%arg0: i32, %arg1: memref<4x81x128xbf16, #tpu.memory_space<vmem>>, %arg2: memref<128x256xbf16, #tpu.memory_space<vmem>>, %arg3: memref<1x256xf32, #tpu.memory_space<vmem>>, %arg4: memref<128x128xbf16, #tpu.memory_space<vmem>>, %arg5: memref<128x128xbf16, #tpu.memory_space<vmem>>, %arg6: memref<1x128xf32, #tpu.memory_space<vmem>>, %arg7: memref<128x128xbf16, #tpu.memory_space<vmem>>, %arg8: memref<1x128xf32, #tpu.memory_space<vmem>>, %arg9: memref<4x81x128xf32, #tpu.memory_space<vmem>>) attributes {dimension_semantics = [#tpu.dimension_semantics<parallel>], iteration_bounds = array<i64: 2>, scalar_prefetch = 0 : i64, scratch_operands = 0 : i64, tpu.core_type = #tpu.core_type<tc>, window_params = [{transform_indices = @transform_0, window_bounds = array<i64: 4, 81, 128>}, {pipeline_mode = #tpu.pipeline_mode<synchronous>, transform_indices = @transform_1, window_bounds = array<i64: 128, 256>}, {pipeline_mode = #tpu.pipeline_mode<synchronous>, transform_indices = @transform_2, window_bounds = array<i64: 1, 256>}, {pipeline_mode = #tpu.pipeline_mode<synchronous>, transform_indices = @transform_3, window_bounds = array<i64: 128, 128>}, {pipeline_mode = #tpu.pipeline_mode<synchronous>, transform_indices = @transform_4, window_bounds = array<i64: 128, 128>}, {pipeline_mode = #tpu.pipeline_mode<synchronous>, transform_indices = @transform_5, window_bounds = array<i64: 1, 128>}, {pipeline_mode = #tpu.pipeline_mode<synchronous>, transform_indices = @transform_6, window_bounds = array<i64: 128, 128>}, {pipeline_mode = #tpu.pipeline_mode<synchronous>, transform_indices = @transform_7, window_bounds = array<i64: 1, 128>}, {transform_indices = @transform_8, window_bounds = array<i64: 4, 81, 128>}]} {
    %c0 = arith.constant 0 : index
    %c0_0 = arith.constant 0 : index
    %0 = vector.load %arg2[%c0, %c0_0] : memref<128x256xbf16, #tpu.memory_space<vmem>>, vector<128x256xbf16>
    %c0_1 = arith.constant 0 : index
    %c0_2 = arith.constant 0 : index
    %1 = vector.load %arg3[%c0_1, %c0_2] : memref<1x256xf32, #tpu.memory_space<vmem>>, vector<1x256xf32>
    %c0_3 = arith.constant 0 : index
    %c0_4 = arith.constant 0 : index
    %2 = vector.load %arg4[%c0_3, %c0_4] : memref<128x128xbf16, #tpu.memory_space<vmem>>, vector<128x128xbf16>
    %c0_5 = arith.constant 0 : index
    %c0_6 = arith.constant 0 : index
    %3 = vector.load %arg5[%c0_5, %c0_6] : memref<128x128xbf16, #tpu.memory_space<vmem>>, vector<128x128xbf16>
    %c0_7 = arith.constant 0 : index
    %c0_8 = arith.constant 0 : index
    %4 = vector.load %arg6[%c0_7, %c0_8] : memref<1x128xf32, #tpu.memory_space<vmem>>, vector<1x128xf32>
    %c0_9 = arith.constant 0 : index
    %c0_10 = arith.constant 0 : index
    %5 = vector.load %arg7[%c0_9, %c0_10] : memref<128x128xbf16, #tpu.memory_space<vmem>>, vector<128x128xbf16>
    %c0_11 = arith.constant 0 : index
    %c0_12 = arith.constant 0 : index
    %6 = vector.load %arg8[%c0_11, %c0_12] : memref<1x128xf32, #tpu.memory_space<vmem>>, vector<1x128xf32>
    %c0_13 = arith.constant 0 : index
    %c0_14 = arith.constant 0 : index
    %c0_15 = arith.constant 0 : index
    %7 = vector.load %arg1[%c0_13, %c0_14, %c0_15] : memref<4x81x128xbf16, #tpu.memory_space<vmem>>, vector<1x81x128xbf16>
    %8 = vector.shape_cast %7 : vector<1x81x128xbf16> to vector<81x128xbf16>
    %cst = arith.constant dense<0.000000e+00> : vector<81x256xf32>
    %9 = tpu.matmul %8, %0, %cst {dimension_numbers = #tpu.dot_dimension_numbers<[1], [0], [0], [1], [0, 0, 1, 1], [], []>} : vector<81x128xbf16>, vector<128x256xbf16>, vector<81x256xf32> -> vector<81x256xf32>
    %10 = vector.broadcast %1 : vector<1x256xf32> to vector<81x256xf32>
    %11 = arith.addf %9, %10 : vector<81x256xf32>
    %cst_16 = arith.constant 0.000000e+00 : f32
    %12 = vector.broadcast %cst_16 : f32 to vector<81x256xf32>
    %13 = arith.maximumf %11, %12 : vector<81x256xf32>
    %14 = vector.extract_strided_slice %13 {offsets = [0, 0], sizes = [81, 128], strides = [1, 1]} : vector<81x256xf32> to vector<81x128xf32>
    %15 = vector.extract_strided_slice %13 {offsets = [0, 128], sizes = [81, 128], strides = [1, 1]} : vector<81x256xf32> to vector<81x128xf32>
    %cst_17 = arith.constant dense<0xFF800000> : vector<128xf32>
    %16 = vector.multi_reduction <maximumf>, %15, %cst_17 [0] : vector<81x128xf32> to vector<128xf32>
    %17 = vector.shape_cast %16 : vector<128xf32> to vector<1x128xf32>
    %cst_18 = arith.constant dense<0.000000e+00> : vector<128xf32>
    %18 = vector.multi_reduction <add>, %15, %cst_18 [0] : vector<81x128xf32> to vector<128xf32>
    %19 = vector.shape_cast %18 : vector<128xf32> to vector<1x128xf32>
    %cst_19 = arith.constant 8.100000e+01 : f32
    %20 = vector.broadcast %cst_19 : f32 to vector<1x128xf32>
    %21 = arith.divf %19, %20 : vector<1x128xf32>
    %22 = arith.truncf %17 : vector<1x128xf32> to vector<1x128xbf16>
    %cst_20 = arith.constant dense<0.000000e+00> : vector<1x128xf32>
    %23 = tpu.matmul %22, %2, %cst_20 {dimension_numbers = #tpu.dot_dimension_numbers<[1], [0], [0], [1], [0, 0, 1, 1], [], []>} : vector<1x128xbf16>, vector<128x128xbf16>, vector<1x128xf32> -> vector<1x128xf32>
    %24 = arith.truncf %21 : vector<1x128xf32> to vector<1x128xbf16>
    %cst_21 = arith.constant dense<0.000000e+00> : vector<1x128xf32>
    %25 = tpu.matmul %24, %3, %cst_21 {dimension_numbers = #tpu.dot_dimension_numbers<[1], [0], [0], [1], [0, 0, 1, 1], [], []>} : vector<1x128xbf16>, vector<128x128xbf16>, vector<1x128xf32> -> vector<1x128xf32>
    %26 = arith.addf %23, %25 : vector<1x128xf32>
    %27 = arith.addf %26, %4 : vector<1x128xf32>
    %28 = vector.broadcast %27 : vector<1x128xf32> to vector<81x128xf32>
    %29 = arith.addf %14, %28 : vector<81x128xf32>
    %30 = arith.truncf %29 : vector<81x128xf32> to vector<81x128xbf16>
    %cst_22 = arith.constant dense<0.000000e+00> : vector<81x128xf32>
    %31 = tpu.matmul %30, %5, %cst_22 {dimension_numbers = #tpu.dot_dimension_numbers<[1], [0], [0], [1], [0, 0, 1, 1], [], []>} : vector<81x128xbf16>, vector<128x128xbf16>, vector<81x128xf32> -> vector<81x128xf32>
    %32 = vector.broadcast %6 : vector<1x128xf32> to vector<81x128xf32>
    %33 = arith.addf %31, %32 : vector<81x128xf32>
    %c0_23 = arith.constant 0 : index
    %c0_24 = arith.constant 0 : index
    %c0_25 = arith.constant 0 : index
    %34 = vector.load %arg9[%c0_23, %c0_24, %c0_25] : memref<4x81x128xf32, #tpu.memory_space<vmem>>, vector<1x81x128xf32>
    %35 = vector.shape_cast %34 : vector<1x81x128xf32> to vector<81x128xf32>
    %36 = vector.shape_cast %33 : vector<81x128xf32> to vector<1x81x128xf32>
    tpu.vector_store %arg9[%c0_23, %c0_24, %c0_25], %36 {strides = array<i32>} : memref<4x81x128xf32, #tpu.memory_space<vmem>>, vector<1x81x128xf32>,
    %c1 = arith.constant 1 : index
    %c0_26 = arith.constant 0 : index
    %c0_27 = arith.constant 0 : index
    %37 = vector.load %arg1[%c1, %c0_26, %c0_27] : memref<4x81x128xbf16, #tpu.memory_space<vmem>>, vector<1x81x128xbf16>
    %38 = vector.shape_cast %37 : vector<1x81x128xbf16> to vector<81x128xbf16>
    %cst_28 = arith.constant dense<0.000000e+00> : vector<81x256xf32>
    %39 = tpu.matmul %38, %0, %cst_28 {dimension_numbers = #tpu.dot_dimension_numbers<[1], [0], [0], [1], [0, 0, 1, 1], [], []>} : vector<81x128xbf16>, vector<128x256xbf16>, vector<81x256xf32> -> vector<81x256xf32>
    %40 = vector.broadcast %1 : vector<1x256xf32> to vector<81x256xf32>
    %41 = arith.addf %39, %40 : vector<81x256xf32>
    %cst_29 = arith.constant 0.000000e+00 : f32
    %42 = vector.broadcast %cst_29 : f32 to vector<81x256xf32>
    %43 = arith.maximumf %41, %42 : vector<81x256xf32>
    %44 = vector.extract_strided_slice %43 {offsets = [0, 0], sizes = [81, 128], strides = [1, 1]} : vector<81x256xf32> to vector<81x128xf32>
    %45 = vector.extract_strided_slice %43 {offsets = [0, 128], sizes = [81, 128], strides = [1, 1]} : vector<81x256xf32> to vector<81x128xf32>
    %cst_30 = arith.constant dense<0xFF800000> : vector<128xf32>
    %46 = vector.multi_reduction <maximumf>, %45, %cst_30 [0] : vector<81x128xf32> to vector<128xf32>
    %47 = vector.shape_cast %46 : vector<128xf32> to vector<1x128xf32>
    %cst_31 = arith.constant dense<0.000000e+00> : vector<128xf32>
    %48 = vector.multi_reduction <add>, %45, %cst_31 [0] : vector<81x128xf32> to vector<128xf32>
    %49 = vector.shape_cast %48 : vector<128xf32> to vector<1x128xf32>
    %cst_32 = arith.constant 8.100000e+01 : f32
    %50 = vector.broadcast %cst_32 : f32 to vector<1x128xf32>
    %51 = arith.divf %49, %50 : vector<1x128xf32>
    %52 = arith.truncf %47 : vector<1x128xf32> to vector<1x128xbf16>
    %cst_33 = arith.constant dense<0.000000e+00> : vector<1x128xf32>
    %53 = tpu.matmul %52, %2, %cst_33 {dimension_numbers = #tpu.dot_dimension_numbers<[1], [0], [0], [1], [0, 0, 1, 1], [], []>} : vector<1x128xbf16>, vector<128x128xbf16>, vector<1x128xf32> -> vector<1x128xf32>
    %54 = arith.truncf %51 : vector<1x128xf32> to vector<1x128xbf16>
    %cst_34 = arith.constant dense<0.000000e+00> : vector<1x128xf32>
    %55 = tpu.matmul %54, %3, %cst_34 {dimension_numbers = #tpu.dot_dimension_numbers<[1], [0], [0], [1], [0, 0, 1, 1], [], []>} : vector<1x128xbf16>, vector<128x128xbf16>, vector<1x128xf32> -> vector<1x128xf32>
    %56 = arith.addf %53, %55 : vector<1x128xf32>
    %57 = arith.addf %56, %4 : vector<1x128xf32>
    %58 = vector.broadcast %57 : vector<1x128xf32> to vector<81x128xf32>
    %59 = arith.addf %44, %58 : vector<81x128xf32>
    %60 = arith.truncf %59 : vector<81x128xf32> to vector<81x128xbf16>
    %cst_35 = arith.constant dense<0.000000e+00> : vector<81x128xf32>
    %61 = tpu.matmul %60, %5, %cst_35 {dimension_numbers = #tpu.dot_dimension_numbers<[1], [0], [0], [1], [0, 0, 1, 1], [], []>} : vector<81x128xbf16>, vector<128x128xbf16>, vector<81x128xf32> -> vector<81x128xf32>
    %62 = vector.broadcast %6 : vector<1x128xf32> to vector<81x128xf32>
    %63 = arith.addf %61, %62 : vector<81x128xf32>
    %c1_36 = arith.constant 1 : index
    %c0_37 = arith.constant 0 : index
    %c0_38 = arith.constant 0 : index
    %64 = vector.load %arg9[%c1_36, %c0_37, %c0_38] : memref<4x81x128xf32, #tpu.memory_space<vmem>>, vector<1x81x128xf32>
    %65 = vector.shape_cast %64 : vector<1x81x128xf32> to vector<81x128xf32>
    %66 = vector.shape_cast %63 : vector<81x128xf32> to vector<1x81x128xf32>
    tpu.vector_store %arg9[%c1_36, %c0_37, %c0_38], %66 {strides = array<i32>} : memref<4x81x128xf32, #tpu.memory_space<vmem>>, vector<1x81x128xf32>,
    %c2 = arith.constant 2 : index
    %c0_39 = arith.constant 0 : index
    %c0_40 = arith.constant 0 : index
    %67 = vector.load %arg1[%c2, %c0_39, %c0_40] : memref<4x81x128xbf16, #tpu.memory_space<vmem>>, vector<1x81x128xbf16>
    %68 = vector.shape_cast %67 : vector<1x81x128xbf16> to vector<81x128xbf16>
    %cst_41 = arith.constant dense<0.000000e+00> : vector<81x256xf32>
    %69 = tpu.matmul %68, %0, %cst_41 {dimension_numbers = #tpu.dot_dimension_numbers<[1], [0], [0], [1], [0, 0, 1, 1], [], []>} : vector<81x128xbf16>, vector<128x256xbf16>, vector<81x256xf32> -> vector<81x256xf32>
    %70 = vector.broadcast %1 : vector<1x256xf32> to vector<81x256xf32>
    %71 = arith.addf %69, %70 : vector<81x256xf32>
    %cst_42 = arith.constant 0.000000e+00 : f32
    %72 = vector.broadcast %cst_42 : f32 to vector<81x256xf32>
    %73 = arith.maximumf %71, %72 : vector<81x256xf32>
    %74 = vector.extract_strided_slice %73 {offsets = [0, 0], sizes = [81, 128], strides = [1, 1]} : vector<81x256xf32> to vector<81x128xf32>
    %75 = vector.extract_strided_slice %73 {offsets = [0, 128], sizes = [81, 128], strides = [1, 1]} : vector<81x256xf32> to vector<81x128xf32>
    %cst_43 = arith.constant dense<0xFF800000> : vector<128xf32>
    %76 = vector.multi_reduction <maximumf>, %75, %cst_43 [0] : vector<81x128xf32> to vector<128xf32>
    %77 = vector.shape_cast %76 : vector<128xf32> to vector<1x128xf32>
    %cst_44 = arith.constant dense<0.000000e+00> : vector<128xf32>
    %78 = vector.multi_reduction <add>, %75, %cst_44 [0] : vector<81x128xf32> to vector<128xf32>
    %79 = vector.shape_cast %78 : vector<128xf32> to vector<1x128xf32>
    %cst_45 = arith.constant 8.100000e+01 : f32
    %80 = vector.broadcast %cst_45 : f32 to vector<1x128xf32>
    %81 = arith.divf %79, %80 : vector<1x128xf32>
    %82 = arith.truncf %77 : vector<1x128xf32> to vector<1x128xbf16>
    %cst_46 = arith.constant dense<0.000000e+00> : vector<1x128xf32>
    %83 = tpu.matmul %82, %2, %cst_46 {dimension_numbers = #tpu.dot_dimension_numbers<[1], [0], [0], [1], [0, 0, 1, 1], [], []>} : vector<1x128xbf16>, vector<128x128xbf16>, vector<1x128xf32> -> vector<1x128xf32>
    %84 = arith.truncf %81 : vector<1x128xf32> to vector<1x128xbf16>
    %cst_47 = arith.constant dense<0.000000e+00> : vector<1x128xf32>
    %85 = tpu.matmul %84, %3, %cst_47 {dimension_numbers = #tpu.dot_dimension_numbers<[1], [0], [0], [1], [0, 0, 1, 1], [], []>} : vector<1x128xbf16>, vector<128x128xbf16>, vector<1x128xf32> -> vector<1x128xf32>
    %86 = arith.addf %83, %85 : vector<1x128xf32>
    %87 = arith.addf %86, %4 : vector<1x128xf32>
    %88 = vector.broadcast %87 : vector<1x128xf32> to vector<81x128xf32>
    %89 = arith.addf %74, %88 : vector<81x128xf32>
    %90 = arith.truncf %89 : vector<81x128xf32> to vector<81x128xbf16>
    %cst_48 = arith.constant dense<0.000000e+00> : vector<81x128xf32>
    %91 = tpu.matmul %90, %5, %cst_48 {dimension_numbers = #tpu.dot_dimension_numbers<[1], [0], [0], [1], [0, 0, 1, 1], [], []>} : vector<81x128xbf16>, vector<128x128xbf16>, vector<81x128xf32> -> vector<81x128xf32>
    %92 = vector.broadcast %6 : vector<1x128xf32> to vector<81x128xf32>
    %93 = arith.addf %91, %92 : vector<81x128xf32>
    %c2_49 = arith.constant 2 : index
    %c0_50 = arith.constant 0 : index
    %c0_51 = arith.constant 0 : index
    %94 = vector.load %arg9[%c2_49, %c0_50, %c0_51] : memref<4x81x128xf32, #tpu.memory_space<vmem>>, vector<1x81x128xf32>
    %95 = vector.shape_cast %94 : vector<1x81x128xf32> to vector<81x128xf32>
    %96 = vector.shape_cast %93 : vector<81x128xf32> to vector<1x81x128xf32>
    tpu.vector_store %arg9[%c2_49, %c0_50, %c0_51], %96 {strides = array<i32>} : memref<4x81x128xf32, #tpu.memory_space<vmem>>, vector<1x81x128xf32>,
    %c3 = arith.constant 3 : index
    %c0_52 = arith.constant 0 : index
    %c0_53 = arith.constant 0 : index
    %97 = vector.load %arg1[%c3, %c0_52, %c0_53] : memref<4x81x128xbf16, #tpu.memory_space<vmem>>, vector<1x81x128xbf16>
    %98 = vector.shape_cast %97 : vector<1x81x128xbf16> to vector<81x128xbf16>
    %cst_54 = arith.constant dense<0.000000e+00> : vector<81x256xf32>
    %99 = tpu.matmul %98, %0, %cst_54 {dimension_numbers = #tpu.dot_dimension_numbers<[1], [0], [0], [1], [0, 0, 1, 1], [], []>} : vector<81x128xbf16>, vector<128x256xbf16>, vector<81x256xf32> -> vector<81x256xf32>
    %100 = vector.broadcast %1 : vector<1x256xf32> to vector<81x256xf32>
    %101 = arith.addf %99, %100 : vector<81x256xf32>
    %cst_55 = arith.constant 0.000000e+00 : f32
    %102 = vector.broadcast %cst_55 : f32 to vector<81x256xf32>
    %103 = arith.maximumf %101, %102 : vector<81x256xf32>
    %104 = vector.extract_strided_slice %103 {offsets = [0, 0], sizes = [81, 128], strides = [1, 1]} : vector<81x256xf32> to vector<81x128xf32>
    %105 = vector.extract_strided_slice %103 {offsets = [0, 128], sizes = [81, 128], strides = [1, 1]} : vector<81x256xf32> to vector<81x128xf32>
    %cst_56 = arith.constant dense<0xFF800000> : vector<128xf32>
    %106 = vector.multi_reduction <maximumf>, %105, %cst_56 [0] : vector<81x128xf32> to vector<128xf32>
    %107 = vector.shape_cast %106 : vector<128xf32> to vector<1x128xf32>
    %cst_57 = arith.constant dense<0.000000e+00> : vector<128xf32>
    %108 = vector.multi_reduction <add>, %105, %cst_57 [0] : vector<81x128xf32> to vector<128xf32>
    %109 = vector.shape_cast %108 : vector<128xf32> to vector<1x128xf32>
    %cst_58 = arith.constant 8.100000e+01 : f32
    %110 = vector.broadcast %cst_58 : f32 to vector<1x128xf32>
    %111 = arith.divf %109, %110 : vector<1x128xf32>
    %112 = arith.truncf %107 : vector<1x128xf32> to vector<1x128xbf16>
    %cst_59 = arith.constant dense<0.000000e+00> : vector<1x128xf32>
    %113 = tpu.matmul %112, %2, %cst_59 {dimension_numbers = #tpu.dot_dimension_numbers<[1], [0], [0], [1], [0, 0, 1, 1], [], []>} : vector<1x128xbf16>, vector<128x128xbf16>, vector<1x128xf32> -> vector<1x128xf32>
    %114 = arith.truncf %111 : vector<1x128xf32> to vector<1x128xbf16>
    %cst_60 = arith.constant dense<0.000000e+00> : vector<1x128xf32>
    %115 = tpu.matmul %114, %3, %cst_60 {dimension_numbers = #tpu.dot_dimension_numbers<[1], [0], [0], [1], [0, 0, 1, 1], [], []>} : vector<1x128xbf16>, vector<128x128xbf16>, vector<1x128xf32> -> vector<1x128xf32>
    %116 = arith.addf %113, %115 : vector<1x128xf32>
    %117 = arith.addf %116, %4 : vector<1x128xf32>
    %118 = vector.broadcast %117 : vector<1x128xf32> to vector<81x128xf32>
    %119 = arith.addf %104, %118 : vector<81x128xf32>
    %120 = arith.truncf %119 : vector<81x128xf32> to vector<81x128xbf16>
    %cst_61 = arith.constant dense<0.000000e+00> : vector<81x128xf32>
    %121 = tpu.matmul %120, %5, %cst_61 {dimension_numbers = #tpu.dot_dimension_numbers<[1], [0], [0], [1], [0, 0, 1, 1], [], []>} : vector<81x128xbf16>, vector<128x128xbf16>, vector<81x128xf32> -> vector<81x128xf32>
    %122 = vector.broadcast %6 : vector<1x128xf32> to vector<81x128xf32>
    %123 = arith.addf %121, %122 : vector<81x128xf32>
    %c3_62 = arith.constant 3 : index
    %c0_63 = arith.constant 0 : index
    %c0_64 = arith.constant 0 : index
    %124 = vector.load %arg9[%c3_62, %c0_63, %c0_64] : memref<4x81x128xf32, #tpu.memory_space<vmem>>, vector<1x81x128xf32>
    %125 = vector.shape_cast %124 : vector<1x81x128xf32> to vector<81x128xf32>
    %126 = vector.shape_cast %123 : vector<81x128xf32> to vector<1x81x128xf32>
    tpu.vector_store %arg9[%c3_62, %c0_63, %c0_64], %126 {strides = array<i32>} : memref<4x81x128xf32, #tpu.memory_space<vmem>>, vector<1x81x128xf32>,
    return
  }
  func.func @transform_0(%arg0: i32) -> (i32, i32, i32) {
    %c0_i32 = arith.constant 0 : i32
    %c0_i32_0 = arith.constant 0 : i32
    %c0_i32_1 = arith.constant 0 : i32
    return %arg0, %c0_i32, %c0_i32_0 : i32, i32, i32
  }
  func.func @transform_1(%arg0: i32) -> (i32, i32) {
    %c0_i32 = arith.constant 0 : i32
    %c0_i32_0 = arith.constant 0 : i32
    %c0_i32_1 = arith.constant 0 : i32
    return %c0_i32, %c0_i32_0 : i32, i32
  }
  func.func @transform_2(%arg0: i32) -> (i32, i32) {
    %c0_i32 = arith.constant 0 : i32
    %c0_i32_0 = arith.constant 0 : i32
    %c0_i32_1 = arith.constant 0 : i32
    return %c0_i32, %c0_i32_0 : i32, i32
  }
  func.func @transform_3(%arg0: i32) -> (i32, i32) {
    %c0_i32 = arith.constant 0 : i32
    %c0_i32_0 = arith.constant 0 : i32
    %c0_i32_1 = arith.constant 0 : i32
    return %c0_i32, %c0_i32_0 : i32, i32
  }
  func.func @transform_4(%arg0: i32) -> (i32, i32) {
    %c0_i32 = arith.constant 0 : i32
    %c0_i32_0 = arith.constant 0 : i32
    %c0_i32_1 = arith.constant 0 : i32
    return %c0_i32, %c0_i32_0 : i32, i32
  }
  func.func @transform_5(%arg0: i32) -> (i32, i32) {
    %c0_i32 = arith.constant 0 : i32
    %c0_i32_0 = arith.constant 0 : i32
    %c0_i32_1 = arith.constant 0 : i32
    return %c0_i32, %c0_i32_0 : i32, i32
  }
  func.func @transform_6(%arg0: i32) -> (i32, i32) {
    %c0_i32 = arith.constant 0 : i32
    %c0_i32_0 = arith.constant 0 : i32
    %c0_i32_1 = arith.constant 0 : i32
    return %c0_i32, %c0_i32_0 : i32, i32
  }
  func.func @transform_7(%arg0: i32) -> (i32, i32) {
    %c0_i32 = arith.constant 0 : i32
    %c0_i32_0 = arith.constant 0 : i32
    %c0_i32_1 = arith.constant 0 : i32
    return %c0_i32, %c0_i32_0 : i32, i32
  }
  func.func @transform_8(%arg0: i32) -> (i32, i32, i32) {
    %c0_i32 = arith.constant 0 : i32
    %c0_i32_0 = arith.constant 0 : i32
    %c0_i32_1 = arith.constant 0 : i32
    return %arg0, %c0_i32, %c0_i32_0 : i32, i32, i32
  }
}

</mosaic_0001>

<llo_original>
// kernel: tpu_custom_call.1
$region0: #{tpu_custom_call.1}
  #allocation0 [shape = 'u32[]', space=smem, size = 0x4, offset = 0x4, fixed_abs, tag = 'smem constant byte address 0x4 - core index']
  #allocation1 [shape = 'u32[144,128]{1,0:T(1,128)}', space=vmem, size = 0x12000, scoped, tag = 'internal scratch']
  %s0 = inlined_call_operand.vmem [shape: bf16[8,81,128], index: 0, kind: input, shape index: {}]
  %s1 = inlined_call_operand.vmem [shape: bf16[128,256], index: 1, kind: input, shape index: {}]
  %s2 = inlined_call_operand.vmem [shape: f32[1,256], index: 2, kind: input, shape index: {}]
  %s3 = inlined_call_operand.vmem [shape: bf16[128,128], index: 3, kind: input, shape index: {}]
  %s4 = inlined_call_operand.vmem [shape: bf16[128,128], index: 4, kind: input, shape index: {}]
  %s5 = inlined_call_operand.vmem [shape: f32[1,128], index: 5, kind: input, shape index: {}]
  %s6 = inlined_call_operand.vmem [shape: bf16[128,128], index: 6, kind: input, shape index: {}]
  %s7 = inlined_call_operand.vmem [shape: f32[1,128], index: 7, kind: input, shape index: {}]
  %s8 = inlined_call_operand.vmem [shape: f32[8,81,128], index: 8, kind: output, shape index: {}]
  %s9 = sld [smem:[#allocation0]]
  $region65: #{tpu_custom_call.1} parent=0
    _
  %s11 = ssub.s32 1, %s9
  %s12 = scalar_select 0, %s11, %s9
  loop: start=0, step=1, limit=4
  $region2: #{tpu_custom_call.1} parent=0 // loop_pre_header
    _
  $region3: #{tpu_custom_call.1} parent=0 // loop_header
    %s14 = sphi 0, %s18
    %p15 = scmp.ge.s32.totalorder %s14, 4
    %s24 = sphi 0, %s26
    %s27 = sphi 0, %s24
    %s28 = sphi 0, %s27
    %s44 = sphi 0, %s28
    %s48 = sphi 0, %s48
    %s50 = sphi 0, %s48
    %s51 = sphi 0, %s50
    %s65 = sphi 0, %s51
    %s69 = sphi 0, %s69
    %s71 = sphi 0, %s69
    %s72 = sphi 0, %s71
    %s86 = sphi 0, %s72
    %s90 = sphi 0, %s90
    %s92 = sphi 0, %s90
    %s93 = sphi 0, %s92
    %s107 = sphi 0, %s93
    %s111 = sphi 0, %s111
    %s113 = sphi 0, %s111
    %s114 = sphi 0, %s113
    %s128 = sphi 0, %s114
    %s132 = sphi 0, %s132
    %s134 = sphi 0, %s132
    %s135 = sphi 0, %s134
    %s149 = sphi 0, %s135
    %s153 = sphi 0, %s153
    %s155 = sphi 0, %s153
    %s156 = sphi 0, %s155
    %s170 = sphi 0, %s156
    %s174 = sphi 0, %s174
    %s176 = sphi 0, %s174
    %s177 = sphi 0, %s176
    %s191 = sphi 0, %s177
    %s197 = sphi 0, %s199
    %s200 = sphi 0, %s197
    %s201 = sphi 0, %s200
    %s217 = sphi 0, %s201
  $region4: #{tpu_custom_call.1} parent=0 // loop_header_branch
    %17 = sbr.rel (%p15) target = $region8
  $region5: #{tpu_custom_call.1} parent=0 // loop_body
    %s19 = ssub.s32 %s14, 1
    %s20 = ssub.s32 %s14, 2
    %s21 = sadd.s32 %s14, 1
    %s22 = ssub.s32 %s14, %s21
    %p23 = scmp.eq.s32.totalorder %s22, 0
    %s25 = sadd.s32 %s24, 1
    %s26 = scalar_select %p23, %s24, %s25
    %p29 = pneg %p23
    %p30 = scmp.eq.s32.totalorder %s14, 1
    %p31 = por %p29, %p30
    %p32 = scmp.ne.s32.totalorder %s24, %s27
    %p33 = scmp.eq.s32.totalorder %s14, 0
    %p34 = por %p32, %p33
    %p35 = scmp.ne.s32.totalorder %s24, %s27
    %p36 = scmp.eq.s32.totalorder %s19, 1
    %p37 = por %p35, %p36
    %p38 = scmp.ne.s32.totalorder %s27, %s28
    %p39 = scmp.eq.s32.totalorder %s19, 0
    %p40 = por %p38, %p39
    %p41 = scmp.ne.s32.totalorder %s27, %s28
    %p42 = scmp.eq.s32.totalorder %s20, 1
    %p43 = por %p41, %p42
    %p45 = scmp.ne.s32.totalorder %s28, %s44
    %p46 = scmp.eq.s32.totalorder %s20, 0
    %p47 = por %p45, %p46
    %s49 = sadd.s32 %s48, 1
    %p52 = scmp.eq.s32.totalorder %s14, 1
    %p53 = scmp.ne.s32.totalorder %s48, %s50
    %p54 = scmp.eq.s32.totalorder %s14, 0
    %p55 = por %p53, %p54
    %p56 = scmp.ne.s32.totalorder %s48, %s50
    %p57 = scmp.eq.s32.totalorder %s19, 1
    %p58 = por %p56, %p57
    %p59 = scmp.ne.s32.totalorder %s50, %s51
    %p60 = scmp.eq.s32.totalorder %s19, 0
    %p61 = por %p59, %p60
    %p62 = scmp.ne.s32.totalorder %s50, %s51
    %p63 = scmp.eq.s32.totalorder %s20, 1
    %p64 = por %p62, %p63
    %p66 = scmp.ne.s32.totalorder %s51, %s65
    %p67 = scmp.eq.s32.totalorder %s20, 0
    %p68 = por %p66, %p67
    %s70 = sadd.s32 %s69, 1
    %p73 = scmp.eq.s32.totalorder %s14, 1
    %p74 = scmp.ne.s32.totalorder %s69, %s71
    %p75 = scmp.eq.s32.totalorder %s14, 0
    %p76 = por %p74, %p75
    %p77 = scmp.ne.s32.totalorder %s69, %s71
    %p78 = scmp.eq.s32.totalorder %s19, 1
    %p79 = por %p77, %p78
    %p80 = scmp.ne.s32.totalorder %s71, %s72
    %p81 = scmp.eq.s32.totalorder %s19, 0
    %p82 = por %p80, %p81
    %p83 = scmp.ne.s32.totalorder %s71, %s72
    %p84 = scmp.eq.s32.totalorder %s20, 1
    %p85 = por %p83, %p84
    %p87 = scmp.ne.s32.totalorder %s72, %s86
    %p88 = scmp.eq.s32.totalorder %s20, 0
    %p89 = por %p87, %p88
    %s91 = sadd.s32 %s90, 1
    %p94 = scmp.eq.s32.totalorder %s14, 1
    %p95 = scmp.ne.s32.totalorder %s90, %s92
    %p96 = scmp.eq.s32.totalorder %s14, 0
    %p97 = por %p95, %p96
    %p98 = scmp.ne.s32.totalorder %s90, %s92
    %p99 = scmp.eq.s32.totalorder %s19, 1
    %p100 = por %p98, %p99
    %p101 = scmp.ne.s32.totalorder %s92, %s93
    %p102 = scmp.eq.s32.totalorder %s19, 0
    %p103 = por %p101, %p102
    %p104 = scmp.ne.s32.totalorder %s92, %s93
    %p105 = scmp.eq.s32.totalorder %s20, 1
    %p106 = por %p104, %p105
    %p108 = scmp.ne.s32.totalorder %s93, %s107
    %p109 = scmp.eq.s32.totalorder %s20, 0
    %p110 = por %p108, %p109
    %s112 = sadd.s32 %s111, 1
    %p115 = scmp.eq.s32.totalorder %s14, 1
    %p116 = scmp.ne.s32.totalorder %s111, %s113
    %p117 = scmp.eq.s32.totalorder %s14, 0
    %p118 = por %p116, %p117
    %p119 = scmp.ne.s32.totalorder %s111, %s113
    %p120 = scmp.eq.s32.totalorder %s19, 1
    %p121 = por %p119, %p120
    %p122 = scmp.ne.s32.totalorder %s113, %s114
    %p123 = scmp.eq.s32.totalorder %s19, 0
    %p124 = por %p122, %p123
    %p125 = scmp.ne.s32.totalorder %s113, %s114
    %p126 = scmp.eq.s32.totalorder %s20, 1
    %p127 = por %p125, %p126
    %p129 = scmp.ne.s32.totalorder %s114, %s128
    %p130 = scmp.eq.s32.totalorder %s20, 0
    %p131 = por %p129, %p130
    %s133 = sadd.s32 %s132, 1
    %p136 = scmp.eq.s32.totalorder %s14, 1
    %p137 = scmp.ne.s32.totalorder %s132, %s134
    %p138 = scmp.eq.s32.totalorder %s14, 0
    %p139 = por %p137, %p138
    %p140 = scmp.ne.s32.totalorder %s132, %s134
    %p141 = scmp.eq.s32.totalorder %s19, 1
    %p142 = por %p140, %p141
    %p143 = scmp.ne.s32.totalorder %s134, %s135
    %p144 = scmp.eq.s32.totalorder %s19, 0
    %p145 = por %p143, %p144
    %p146 = scmp.ne.s32.totalorder %s134, %s135
    %p147 = scmp.eq.s32.totalorder %s20, 1
    %p148 = por %p146, %p147
    %p150 = scmp.ne.s32.totalorder %s135, %s149
    %p151 = scmp.eq.s32.totalorder %s20, 0
    %p152 = por %p150, %p151
    %s154 = sadd.s32 %s153, 1
    %p157 = scmp.eq.s32.totalorder %s14, 1
    %p158 = scmp.ne.s32.totalorder %s153, %s155
    %p159 = scmp.eq.s32.totalorder %s14, 0
    %p160 = por %p158, %p159
    %p161 = scmp.ne.s32.totalorder %s153, %s155
    %p162 = scmp.eq.s32.totalorder %s19, 1
    %p163 = por %p161, %p162
    %p164 = scmp.ne.s32.totalorder %s155, %s156
    %p165 = scmp.eq.s32.totalorder %s19, 0
    %p166 = por %p164, %p165
    %p167 = scmp.ne.s32.totalorder %s155, %s156
    %p168 = scmp.eq.s32.totalorder %s20, 1
    %p169 = por %p167, %p168
    %p171 = scmp.ne.s32.totalorder %s156, %s170
    %p172 = scmp.eq.s32.totalorder %s20, 0
    %p173 = por %p171, %p172
    %s175 = sadd.s32 %s174, 1
    %p178 = scmp.eq.s32.totalorder %s14, 1
    %p179 = scmp.ne.s32.totalorder %s174, %s176
    %p180 = scmp.eq.s32.totalorder %s14, 0
    %p181 = por %p179, %p180
    %p182 = scmp.ne.s32.totalorder %s174, %s176
    %p183 = scmp.eq.s32.totalorder %s19, 1
    %p184 = por %p182, %p183
    %p185 = scmp.ne.s32.totalorder %s176, %s177
    %p186 = scmp.eq.s32.totalorder %s19, 0
    %p187 = por %p185, %p186
    %p188 = scmp.ne.s32.totalorder %s176, %s177
    %p189 = scmp.eq.s32.totalorder %s20, 1
    %p190 = por %p188, %p189
    %p192 = scmp.ne.s32.totalorder %s177, %s191
    %p193 = scmp.eq.s32.totalorder %s20, 0
    %p194 = por %p192, %p193
    %s195 = ssub.s32 %s14, %s21
    %p196 = scmp.eq.s32.totalorder %s195, 0
    %s198 = sadd.s32 %s197, 1
    %s199 = scalar_select %p196, %s197, %s198
    %p202 = pneg %p196
    %p203 = scmp.eq.s32.totalorder %s14, 1
    %p204 = por %p202, %p203
    %p205 = scmp.ne.s32.totalorder %s197, %s200
    %p206 = scmp.eq.s32.totalorder %s14, 0
    %p207 = por %p205, %p206
    %p208 = scmp.ne.s32.totalorder %s197, %s200
    %p209 = scmp.eq.s32.totalorder %s19, 1
    %p210 = por %p208, %p209
    %p211 = scmp.ne.s32.totalorder %s200, %s201
    %p212 = scmp.eq.s32.totalorder %s19, 0
    %p213 = por %p211, %p212
    %p214 = scmp.ne.s32.totalorder %s200, %s201
    %p215 = scmp.eq.s32.totalorder %s20, 1
    %p216 = por %p214, %p215
    %p218 = scmp.ne.s32.totalorder %s201, %s217
    %p219 = scmp.eq.s32.totalorder %s20, 0
    %p220 = por %p218, %p219
    %p221 = scmp.le.s32.totalorder 1, %s14
    %p222 = scmp.lt.s32.totalorder %s14, 3
    %p223 = pnand %p221, %p222
    %p224 = pneg %p223
    // Predicated region
    $region9: #{tpu_custom_call.1} parent=5 // pred_check
      _
    $region10: #{tpu_custom_call.1} parent=5 // pred_check_branch
      %226 = sbr.rel (%p223) target = $region12
    $region11: #{tpu_custom_call.1} parent=5 // pred_region
      %s227 = ssub.s32 %s14, 1
      // Predicated region
      $region13: #{tpu_custom_call.1} parent=11 // pred_check
        %p228 = pneg %p61
      $region14: #{tpu_custom_call.1} parent=11 // pred_check_branch
        %230 = sbr.rel (%p228) target = $region16
      $region15: #{tpu_custom_call.1} parent=11 // pred_region
        _
      $region16: #{tpu_custom_call.1} parent=11 // pred_fallthru
        _
      // Predicated region
      $region17: #{tpu_custom_call.1} parent=11 // pred_check
        %p231 = pneg %p82
      $region18: #{tpu_custom_call.1} parent=11 // pred_check_branch
        %233 = sbr.rel (%p231) target = $region20
      $region19: #{tpu_custom_call.1} parent=11 // pred_region
        _
      $region20: #{tpu_custom_call.1} parent=11 // pred_fallthru
        _
      // Predicated region
      $region21: #{tpu_custom_call.1} parent=11 // pred_check
        %p234 = pneg %p103
      $region22: #{tpu_custom_call.1} parent=11 // pred_check_branch
        %236 = sbr.rel (%p234) target = $region24
      $region23: #{tpu_custom_call.1} parent=11 // pred_region
        _
      $region24: #{tpu_custom_call.1} parent=11 // pred_fallthru
        _
      // Predicated region
      $region25: #{tpu_custom_call.1} parent=11 // pred_check
        %p237 = pneg %p124
      $region26: #{tpu_custom_call.1} parent=11 // pred_check_branch
        %239 = sbr.rel (%p237) target = $region28
      $region27: #{tpu_custom_call.1} parent=11 // pred_region
        _
      $region28: #{tpu_custom_call.1} parent=11 // pred_fallthru
        _
      // Predicated region
      $region29: #{tpu_custom_call.1} parent=11 // pred_check
        %p240 = pneg %p145
      $region30: #{tpu_custom_call.1} parent=11 // pred_check_branch
        %242 = sbr.rel (%p240) target = $region32
      $region31: #{tpu_custom_call.1} parent=11 // pred_region
        _
      $region32: #{tpu_custom_call.1} parent=11 // pred_fallthru
        _
      // Predicated region
      $region33: #{tpu_custom_call.1} parent=11 // pred_check
        %p243 = pneg %p166
      $region34: #{tpu_custom_call.1} parent=11 // pred_check_branch
        %245 = sbr.rel (%p243) target = $region36
      $region35: #{tpu_custom_call.1} parent=11 // pred_region
        _
      $region36: #{tpu_custom_call.1} parent=11 // pred_fallthru
        _
      // Predicated region
      $region37: #{tpu_custom_call.1} parent=11 // pred_check
        %p246 = pneg %p187
      $region38: #{tpu_custom_call.1} parent=11 // pred_check_branch
        %248 = sbr.rel (%p246) target = $region40
      $region39: #{tpu_custom_call.1} parent=11 // pred_region
        _
      $region40: #{tpu_custom_call.1} parent=11 // pred_fallthru
        _
    $region12: #{tpu_custom_call.1} parent=5 // pred_fallthru
      _
    %p249 = scmp.lt.s32.totalorder %s14, 2
    // Predicated region
    $region41: #{tpu_custom_call.1} parent=5 // pred_check
      %p250 = pneg %p249
    $region42: #{tpu_custom_call.1} parent=5 // pred_check_branch
      %252 = sbr.rel (%p250) target = $region44
    $region43: #{tpu_custom_call.1} parent=5 // pred_region
      // Predicated region
      $region45: #{tpu_custom_call.1} parent=43 // pred_check
        %p253 = pneg %p34
      $region46: #{tpu_custom_call.1} parent=43 // pred_check_branch
        %255 = sbr.rel (%p253) target = $region48
      $region47: #{tpu_custom_call.1} parent=43 // pred_region
        %s256 = smul.u32 4, %s14
        %p257 = scmp.lt.s32.totalorder %s256, 7
        %s258 = scalar_select %p257, %s256, 7
        %s259 = smul.addr %s258, 11
        %s260 = smul.addr %s259, 4
        %s261 = scalar_lea.vmem %s0, %s260
        %s262 = smul.u32 4, %s14
      $region48: #{tpu_custom_call.1} parent=43 // pred_fallthru
        _
    $region44: #{tpu_custom_call.1} parent=5 // pred_fallthru
      _
    %p263 = scmp.le.s32.totalorder 1, %s14
    %p264 = scmp.lt.s32.totalorder %s14, 3
    %p265 = pnand %p263, %p264
    %p266 = pneg %p265
    // Predicated region
    $region49: #{tpu_custom_call.1} parent=5 // pred_check
      _
    $region50: #{tpu_custom_call.1} parent=5 // pred_check_branch
      %268 = sbr.rel (%p265) target = $region52
    $region51: #{tpu_custom_call.1} parent=5 // pred_region
      %s269 = ssub.s32 %s14, 1
      %s270 = smul.u32 4, %s19
      %p271 = scmp.lt.s32.totalorder %s270, 7
      %s272 = scalar_select %p271, %s270, 7
      %s273 = smul.addr %s272, 11
      %s274 = smul.addr %s273, 4
      %s275 = scalar_lea.vmem %s0, %s274
      %p276 = pneg %p40
      %p277 = pneg %p37
      %p278 = pneg %p61
      %p279 = pneg %p58
      %p280 = pneg %p82
      %p281 = pneg %p79
      %p282 = pneg %p103
      %p283 = pneg %p100
      %p284 = pneg %p124
      %p285 = pneg %p121
      %p286 = pneg %p145
      %p287 = pneg %p142
      %p288 = pneg %p166
      %p289 = pneg %p163
      %p290 = pneg %p187
      %p291 = pneg %p184
      %p292 = pneg %p213
      %p293 = pneg %p210
      %s294 = smul.u32 4, %s19
      %p295 = scmp.lt.s32.totalorder %s294, 7
      %s296 = scalar_select %p295, %s294, 7
      %s297 = smul.addr %s296, 11
      %s298 = smul.addr %s297, 8
      %s299 = scalar_lea.vmem %s8, %s298
      %s300 = smul.u32 4, %s19
      %p301 = scmp.lt.s32.totalorder %s300, 7
      %s302 = scalar_select %p301, %s300, 7
      %s303 = smul.addr %s302, 11
      %s304 = smul.addr %s303, 4
      %s305 = scalar_lea.vmem %s0, %s304
      %s306 = smul.u32 4, %s19
      %s307 = smul.u32 4, %s19
      %p308 = scmp.lt.s32.totalorder %s307, 7
      %s309 = scalar_select %p308, %s307, 7
      %s310 = smul.addr %s309, 11
      %s311 = smul.addr %s310, 8
      %s312 = scalar_lea.vmem %s8, %s311
      %s313 = smul.u32 4, %s19
      %v315 = vld [vmem:[%s1] sm:$0xff]
      %v316 = vld [vmem:[%s1 + $0x8] sm:$0xff]
      %v317 = vld [vmem:[%s1 + $0x10] sm:$0xff]
      %v318 = vld [vmem:[%s1 + $0x18] sm:$0xff]
      %v319 = vld [vmem:[%s1 + $0x20] sm:$0xff]
      %v320 = vld [vmem:[%s1 + $0x28] sm:$0xff]
      %v321 = vld [vmem:[%s1 + $0x30] sm:$0xff]
      %v322 = vld [vmem:[%s1 + $0x38] sm:$0xff]
      %v323 = vld [vmem:[%s1 + $0x40] sm:$0xff]
      %v324 = vld [vmem:[%s1 + $0x48] sm:$0xff]
      %v325 = vld [vmem:[%s1 + $0x50] sm:$0xff]
      %v326 = vld [vmem:[%s1 + $0x58] sm:$0xff]
      %v327 = vld [vmem:[%s1 + $0x60] sm:$0xff]
      %v328 = vld [vmem:[%s1 + $0x68] sm:$0xff]
      %v329 = vld [vmem:[%s1 + $0x70] sm:$0xff]
      %v330 = vld [vmem:[%s1 + $0x78] sm:$0xff]
      %v331 = vld [vmem:[%s2] sm:$0x3]
      %v332 = vld [vmem:[%s3] sm:$0xf]
      %v333 = vld [vmem:[%s3 + $0x4] sm:$0xf]
      %v334 = vld [vmem:[%s3 + $0x8] sm:$0xf]
      %v335 = vld [vmem:[%s3 + $0xc] sm:$0xf]
      %v336 = vld [vmem:[%s3 + $0x10] sm:$0xf]
      %v337 = vld [vmem:[%s3 + $0x14] sm:$0xf]
      %v338 = vld [vmem:[%s3 + $0x18] sm:$0xf]
      %v339 = vld [vmem:[%s3 + $0x1c] sm:$0xf]
      %v340 = vld [vmem:[%s3 + $0x20] sm:$0xf]
      %v341 = vld [vmem:[%s3 + $0x24] sm:$0xf]
      %v342 = vld [vmem:[%s3 + $0x28] sm:$0xf]
      %v343 = vld [vmem:[%s3 + $0x2c] sm:$0xf]
      %v344 = vld [vmem:[%s3 + $0x30] sm:$0xf]
      %v345 = vld [vmem:[%s3 + $0x34] sm:$0xf]
      %v346 = vld [vmem:[%s3 + $0x38] sm:$0xf]
      %v347 = vld [vmem:[%s3 + $0x3c] sm:$0xf]
      %v348 = vld [vmem:[%s4] sm:$0xf]
      %v349 = vld [vmem:[%s4 + $0x4] sm:$0xf]
      %v350 = vld [vmem:[%s4 + $0x8] sm:$0xf]
      %v351 = vld [vmem:[%s4 + $0xc] sm:$0xf]
      %v352 = vld [vmem:[%s4 + $0x10] sm:$0xf]
      %v353 = vld [vmem:[%s4 + $0x14] sm:$0xf]
      %v354 = vld [vmem:[%s4 + $0x18] sm:$0xf]
      %v355 = vld [vmem:[%s4 + $0x1c] sm:$0xf]
      %v356 = vld [vmem:[%s4 + $0x20] sm:$0xf]
      %v357 = vld [vmem:[%s4 + $0x24] sm:$0xf]
      %v358 = vld [vmem:[%s4 + $0x28] sm:$0xf]
      %v359 = vld [vmem:[%s4 + $0x2c] sm:$0xf]
      %v360 = vld [vmem:[%s4 + $0x30] sm:$0xf]
      %v361 = vld [vmem:[%s4 + $0x34] sm:$0xf]
      %v362 = vld [vmem:[%s4 + $0x38] sm:$0xf]
      %v363 = vld [vmem:[%s4 + $0x3c] sm:$0xf]
      %v364 = vld [vmem:[%s5] sm:$0x1]
      %v365 = vld [vmem:[%s6] sm:$0xf]
      %v366 = vld [vmem:[%s6 + $0x4] sm:$0xf]
      %v367 = vld [vmem:[%s6 + $0x8] sm:$0xf]
      %v368 = vld [vmem:[%s6 + $0xc] sm:$0xf]
      %v369 = vld [vmem:[%s6 + $0x10] sm:$0xf]
      %v370 = vld [vmem:[%s6 + $0x14] sm:$0xf]
      %v371 = vld [vmem:[%s6 + $0x18] sm:$0xf]
      %v372 = vld [vmem:[%s6 + $0x1c] sm:$0xf]
      %v373 = vld [vmem:[%s6 + $0x20] sm:$0xf]
      %v374 = vld [vmem:[%s6 + $0x24] sm:$0xf]
      %v375 = vld [vmem:[%s6 + $0x28] sm:$0xf]
      %v376 = vld [vmem:[%s6 + $0x2c] sm:$0xf]
      %v377 = vld [vmem:[%s6 + $0x30] sm:$0xf]
      %v378 = vld [vmem:[%s6 + $0x34] sm:$0xf]
      %v379 = vld [vmem:[%s6 + $0x38] sm:$0xf]
      %v380 = vld [vmem:[%s6 + $0x3c] sm:$0xf]
      %v381 = vld [vmem:[%s7] sm:$0x1]
      %v382 = vld [vmem:[%s305] sm:$0xf]
      %v383 = vld [vmem:[%s305 + $0x4] sm:$0xf]
      %v384 = vld [vmem:[%s305 + $0x8] sm:$0xf]
      %v385 = vld [vmem:[%s305 + $0xc] sm:$0xf]
      %v386 = vld [vmem:[%s305 + $0x10] sm:$0xf]
      %v387 = vld [vmem:[%s305 + $0x14] sm:$0xf]
      %v388 = vld [vmem:[%s305 + $0x18] sm:$0xf]
      %v389 = vld [vmem:[%s305 + $0x1c] sm:$0xf]
      %v390 = vld [vmem:[%s305 + $0x20] sm:$0xf]
      %v391 = vld [vmem:[%s305 + $0x24] sm:$0xf]
      %v392 = vld [vmem:[%s305 + $0x28] sm:$0x1]
      %v394 = vlaneseq
      %v395 = vshrl.u32 %v394, 7
      %v396 = vsub.s32 0, %v395
      %v397 = vrot.slane %v331, %v396
      %v398 = vlaneseq
      %v399 = vshrl.u32 %v398, 7
      %v400 = vsub.s32 1, %v399
      %v401 = vrot.slane %v331, %v400
      %v415 = vunpack.c.l.b16 %v382
      %v416 = vunpack.c.l.b16 %v383
      %v417 = vunpack.c.l.b16 %v384
      %v418 = vunpack.c.l.b16 %v385
      %v419 = vunpack.c.l.b16 %v386
      %v420 = vunpack.c.l.b16 %v387
      %v421 = vunpack.c.l.b16 %v388
      %v422 = vunpack.c.l.b16 %v389
      %v423 = vunpack.c.l.b16 %v390
      %v424 = vunpack.c.l.b16 %v391
      %v425 = vunpack.c.l.b16 %v392
      %v426 = vpack.c.b16 %v416, %v415
      %v427 = vpack.c.b16 %v418, %v417
      %v428 = vpack.c.b16 %v420, %v419
      %v429 = vpack.c.b16 %v422, %v421
      %v430 = vpack.c.b16 %v424, %v423
      %v431 = vpack.c.b16 %v425, %v425
      %v454 = vunpack.c.l.b16 %v315
      %v455 = vunpack.c.h.b16 %v315
      %v456 = vunpack.c.l.b16 %v316
      %v457 = vunpack.c.h.b16 %v316
      %v458 = vunpack.c.l.b16 %v317
      %v459 = vunpack.c.h.b16 %v317
      %v460 = vunpack.c.l.b16 %v318
      %v461 = vunpack.c.h.b16 %v318
      %v462 = vunpack.c.l.b16 %v319
      %v463 = vunpack.c.h.b16 %v319
      %v464 = vunpack.c.l.b16 %v320
      %v465 = vunpack.c.h.b16 %v320
      %v466 = vunpack.c.l.b16 %v321
      %v467 = vunpack.c.h.b16 %v321
      %v468 = vunpack.c.l.b16 %v322
      %v469 = vunpack.c.h.b16 %v322
      %v470 = vunpack.c.l.b16 %v323
      %v471 = vunpack.c.h.b16 %v323
      %v472 = vunpack.c.l.b16 %v324
      %v473 = vunpack.c.h.b16 %v324
      %v474 = vunpack.c.l.b16 %v325
      %v475 = vunpack.c.h.b16 %v325
      %v476 = vunpack.c.l.b16 %v326
      %v477 = vunpack.c.h.b16 %v326
      %v478 = vunpack.c.l.b16 %v327
      %v479 = vunpack.c.h.b16 %v327
      %v480 = vunpack.c.l.b16 %v328
      %v481 = vunpack.c.h.b16 %v328
      %v482 = vunpack.c.l.b16 %v329
      %v483 = vunpack.c.h.b16 %v329
      %v484 = vunpack.c.l.b16 %v330
      %v485 = vunpack.c.h.b16 %v330
      %v486 = vpack.c.b16 %v456, %v454
      %v487 = vpack.c.b16 %v457, %v455
      %v488 = vpack.c.b16 %v460, %v458
      %v489 = vpack.c.b16 %v461, %v459
      %v490 = vpack.c.b16 %v464, %v462
      %v491 = vpack.c.b16 %v465, %v463
      %v492 = vpack.c.b16 %v468, %v466
      %v493 = vpack.c.b16 %v469, %v467
      %v494 = vpack.c.b16 %v472, %v470
      %v495 = vpack.c.b16 %v473, %v471
      %v496 = vpack.c.b16 %v476, %v474
      %v497 = vpack.c.b16 %v477, %v475
      %v498 = vpack.c.b16 %v480, %v478
      %v499 = vpack.c.b16 %v481, %v479
      %v500 = vpack.c.b16 %v484, %v482
      %v501 = vpack.c.b16 %v485, %v483
      %518 = vmatprep.subr.bf16.mxu0 %v487
      %519 = vmatpush1.bf16.msra.mxu0 %v486
      %520 = vmatprep.subr.bf16.mxu0 %v489
      %521 = vmatpush1.bf16.msra.mxu0 %v488
      %522 = vmatprep.subr.bf16.mxu0 %v491
      %523 = vmatpush1.bf16.msra.mxu0 %v490
      %524 = vmatprep.subr.bf16.mxu0 %v493
      %525 = vmatpush1.bf16.msra.mxu0 %v492
      %526 = vmatprep.subr.bf16.mxu0 %v495
      %527 = vmatpush1.bf16.msra.mxu0 %v494
      %528 = vmatprep.subr.bf16.mxu0 %v497
      %529 = vmatpush1.bf16.msra.mxu0 %v496
      %530 = vmatprep.subr.bf16.mxu0 %v499
      %531 = vmatpush1.bf16.msra.mxu0 %v498
      %532 = vmatprep.subr.bf16.mxu0 %v501
      %533 = vmatpush1.bf16.msra.mxu0 %v500
      %534 = vmatprep.subr.bf16.mxu0 0
      %535 = vmatpush1.bf16.msra.mxu0 0
      %536 = vmatprep.subr.bf16.mxu0 0
      %537 = vmatpush1.bf16.msra.mxu0 0
      %538 = vmatprep.subr.bf16.mxu0 0
      %539 = vmatpush1.bf16.msra.mxu0 0
      %540 = vmatprep.subr.bf16.mxu0 0
      %541 = vmatpush1.bf16.msra.mxu0 0
      %542 = vmatprep.subr.bf16.mxu0 0
      %543 = vmatpush1.bf16.msra.mxu0 0
      %544 = vmatprep.subr.bf16.mxu0 0
      %545 = vmatpush1.bf16.msra.mxu0 0
      %546 = vmatprep.subr.bf16.mxu0 0
      %547 = vmatpush1.bf16.msra.mxu0 0
      %548 = vmatprep.subr.bf16.mxu0 0
      %549 = vmatpush1.bf16.msra.mxu0 0
      %550 = vmatprep.mubr.bf16.mxu0 0
      %551 = vmatmul.mubr.bf16.gmra.mrb[0].mxu0 %v426
      %v552 = vpop.f32.mrb[0].mxu0
      %v553 = vadd.f32 %v397, %v552
      %v554 = vpop.f32.mrb[0].mxu0
      %v555 = vadd.f32 %v401, %v554
      %v556 = vpop.f32.mrb[0].mxu0
      %v557 = vadd.f32 %v397, %v556
      %v558 = vpop.f32.mrb[0].mxu0
      %v559 = vadd.f32 %v401, %v558
      %560 = vmatprep.mubr.bf16.mxu0 0
      %561 = vmatmul.mubr.bf16.gmra.mrb[0].mxu0 %v427
      %v562 = vpop.f32.mrb[0].mxu0
      %v563 = vadd.f32 %v397, %v562
      %v564 = vpop.f32.mrb[0].mxu0
      %v565 = vadd.f32 %v401, %v564
      %v566 = vpop.f32.mrb[0].mxu0
      %v567 = vadd.f32 %v397, %v566
      %v568 = vpop.f32.mrb[0].mxu0
      %v569 = vadd.f32 %v401, %v568
      %570 = vmatprep.mubr.bf16.mxu0 0
      %571 = vmatmul.mubr.bf16.gmra.mrb[0].mxu0 %v428
      %v572 = vpop.f32.mrb[0].mxu0
      %v573 = vadd.f32 %v397, %v572
      %v574 = vpop.f32.mrb[0].mxu0
      %v575 = vadd.f32 %v401, %v574
      %v576 = vpop.f32.mrb[0].mxu0
      %v577 = vadd.f32 %v397, %v576
      %v578 = vpop.f32.mrb[0].mxu0
      %v579 = vadd.f32 %v401, %v578
      %580 = vmatprep.mubr.bf16.mxu0 0
      %581 = vmatmul.mubr.bf16.gmra.mrb[0].mxu0 %v429
      %v582 = vpop.f32.mrb[0].mxu0
      %v583 = vadd.f32 %v397, %v582
      %v584 = vpop.f32.mrb[0].mxu0
      %v585 = vadd.f32 %v401, %v584
      %v586 = vpop.f32.mrb[0].mxu0
      %v587 = vadd.f32 %v397, %v586
      %v588 = vpop.f32.mrb[0].mxu0
      %v589 = vadd.f32 %v401, %v588
      %590 = vmatprep.mubr.bf16.mxu0 0
      %591 = vmatmul.mubr.bf16.gmra.mrb[0].mxu0 %v430
      %v592 = vpop.f32.mrb[0].mxu0
      %v593 = vadd.f32 %v397, %v592
      %v594 = vpop.f32.mrb[0].mxu0
      %v595 = vadd.f32 %v401, %v594
      %v596 = vpop.f32.mrb[0].mxu0
      %v597 = vadd.f32 %v397, %v596
      %v598 = vpop.f32.mrb[0].mxu0
      %v599 = vadd.f32 %v401, %v598
      %600 = vmatprep.mubr.bf16.mxu0 0
      %601 = vmatmul.mubr.bf16.gmra.mrb[0].mxu0 %v431
      %v602 = vpop.f32.mrb[0].mxu0
      %v603 = vadd.f32 %v397, %v602
      %v604 = vpop.f32.mrb[0].mxu0
      %v605 = vadd.f32 %v401, %v604
      %v606 = vpop.f32.mrb[0].mxu0
      %v607 = vpop.f32.mrb[0].mxu0
      %608 = vdwg.mxu0
      %v609 = vmax.f32 %v553, 0.0
      %v610 = vmax.f32 %v555, 0.0
      %v611 = vmax.f32 %v557, 0.0
      %v612 = vmax.f32 %v559, 0.0
      %v613 = vmax.f32 %v563, 0.0
      %v614 = vmax.f32 %v565, 0.0
      %v615 = vmax.f32 %v567, 0.0
      %v616 = vmax.f32 %v569, 0.0
      %v617 = vmax.f32 %v573, 0.0
      %v618 = vmax.f32 %v575, 0.0
      %v619 = vmax.f32 %v577, 0.0
      %v620 = vmax.f32 %v579, 0.0
      %v621 = vmax.f32 %v583, 0.0
      %v622 = vmax.f32 %v585, 0.0
      %v623 = vmax.f32 %v587, 0.0
      %v624 = vmax.f32 %v589, 0.0
      %v625 = vmax.f32 %v593, 0.0
      %v626 = vmax.f32 %v595, 0.0
      %v627 = vmax.f32 %v597, 0.0
      %v628 = vmax.f32 %v599, 0.0
      %v629 = vmax.f32 %v603, 0.0
      %v630 = vmax.f32 %v605, 0.0
      %v631 = vmax.f32 %v610, %v618
      %v632 = vmax.f32 %v612, %v620
      %v633 = vmax.f32 %v614, %v622
      %v634 = vmax.f32 %v616, %v624
      %v635 = vmax.f32 %v631, %v626
      %v636 = vmax.f32 %v632, %v628
      %vm637 = vcmask 1040384
      %v638 = vsel %vm637, %v630, -inf
      %v639 = vmax.f32 %v633, %v638
      %v640 = vmax.f32 %v635, %v636
      %v641 = vmax.f32 %v639, %v634
      %v642 = vmax.f32 %v640, %v641
      %v643 = vrot.slane %v642, 4
      %v644 = vmax.f32 %v642, %v643
      %v645 = vrot.slane %v644, 2
      %v646 = vmax.f32 %v644, %v645
      %v647 = vrot.slane %v646, 1
      %v648 = vmax.f32 %v646, %v647
      %v649 = vadd.f32 %v610, %v612
      %v650 = vadd.f32 %v649, %v614
      %v651 = vadd.f32 %v650, %v616
      %v652 = vadd.f32 %v651, %v618
      %v653 = vadd.f32 %v652, %v620
      %v654 = vadd.f32 %v653, %v622
      %v655 = vadd.f32 %v654, %v624
      %v656 = vadd.f32 %v655, %v626
      %v657 = vadd.f32 %v656, %v628
      %v658 = vsel %vm637, %v630, 0.0
      %v659 = vadd.f32 %v657, %v658
      %v660 = vrot.slane %v659, 4
      %v661 = vadd.f32 %v659, %v660
      %v662 = vrot.slane %v661, 2
      %v663 = vadd.f32 %v661, %v662
      %v664 = vrot.slane %v663, 1
      %v665 = vadd.f32 %v663, %v664
      %v666 = vrcp.pop 81.0
      %v667 = vmul.f32 %v665, %v666
      %v668 = vpack.c.bf16 %v648, %v648
      %v669 = vpack.c.bf16 %v667, %v667
      %v686 = vunpack.c.l.b16 %v348
      %v687 = vunpack.c.l.b16 %v349
      %v688 = vunpack.c.l.b16 %v350
      %v689 = vunpack.c.l.b16 %v351
      %v690 = vunpack.c.l.b16 %v352
      %v691 = vunpack.c.l.b16 %v353
      %v692 = vunpack.c.l.b16 %v354
      %v693 = vunpack.c.l.b16 %v355
      %v694 = vunpack.c.l.b16 %v356
      %v695 = vunpack.c.l.b16 %v357
      %v696 = vunpack.c.l.b16 %v358
      %v697 = vunpack.c.l.b16 %v359
      %v698 = vunpack.c.l.b16 %v360
      %v699 = vunpack.c.l.b16 %v361
      %v700 = vunpack.c.l.b16 %v362
      %v701 = vunpack.c.l.b16 %v363
      %v702 = vpack.c.b16 %v687, %v686
      %v703 = vpack.c.b16 %v689, %v688
      %v704 = vpack.c.b16 %v691, %v690
      %v705 = vpack.c.b16 %v693, %v692
      %v706 = vpack.c.b16 %v695, %v694
      %v707 = vpack.c.b16 %v697, %v696
      %v708 = vpack.c.b16 %v699, %v698
      %v709 = vpack.c.b16 %v701, %v700
      %718 = vmatprep.subr.bf16.mxu0 0
      %719 = vmatpush1.bf16.msra.mxu0 %v702
      %720 = vmatprep.subr.bf16.mxu0 0
      %721 = vmatpush1.bf16.msra.mxu0 %v703
      %722 = vmatprep.subr.bf16.mxu0 0
      %723 = vmatpush1.bf16.msra.mxu0 %v704
      %724 = vmatprep.subr.bf16.mxu0 0
      %725 = vmatpush1.bf16.msra.mxu0 %v705
      %726 = vmatprep.subr.bf16.mxu0 0
      %727 = vmatpush1.bf16.msra.mxu0 %v706
      %728 = vmatprep.subr.bf16.mxu0 0
      %729 = vmatpush1.bf16.msra.mxu0 %v707
      %730 = vmatprep.subr.bf16.mxu0 0
      %731 = vmatpush1.bf16.msra.mxu0 %v708
      %732 = vmatprep.subr.bf16.mxu0 0
      %733 = vmatpush1.bf16.msra.mxu0 %v709
      %734 = vmatprep.subr.bf16.mxu0 0
      %735 = vmatpush1.bf16.msra.mxu0 0
      %736 = vmatprep.subr.bf16.mxu0 0
      %737 = vmatpush1.bf16.msra.mxu0 0
      %738 = vmatprep.subr.bf16.mxu0 0
      %739 = vmatpush1.bf16.msra.mxu0 0
      %740 = vmatprep.subr.bf16.mxu0 0
      %741 = vmatpush1.bf16.msra.mxu0 0
      %742 = vmatprep.subr.bf16.mxu0 0
      %743 = vmatpush1.bf16.msra.mxu0 0
      %744 = vmatprep.subr.bf16.mxu0 0
      %745 = vmatpush1.bf16.msra.mxu0 0
      %746 = vmatprep.subr.bf16.mxu0 0
      %747 = vmatpush1.bf16.msra.mxu0 0
      %748 = vmatprep.subr.bf16.mxu0 0
      %749 = vmatpush1.bf16.msra.mxu0 0
      %750 = vmatprep.mubr.bf16.mxu0 0
      %751 = vmatmul.mubr.bf16.gmra.mrb[0].mxu0 %v669
      %v752 = vpop.f32.mrb[0].mxu0
      %v753 = vadd.f32 0.0, %v752
      %v754 = vpop.f32.mrb[0].mxu0
      %v755 = vpop.f32.mrb[0].mxu0
      %v756 = vpop.f32.mrb[0].mxu0
      %757 = vdwg.mxu0
      %v774 = vunpack.c.l.b16 %v332
      %v775 = vunpack.c.l.b16 %v333
      %v776 = vunpack.c.l.b16 %v334
      %v777 = vunpack.c.l.b16 %v335
      %v778 = vunpack.c.l.b16 %v336
      %v779 = vunpack.c.l.b16 %v337
      %v780 = vunpack.c.l.b16 %v338
      %v781 = vunpack.c.l.b16 %v339
      %v782 = vunpack.c.l.b16 %v340
      %v783 = vunpack.c.l.b16 %v341
      %v784 = vunpack.c.l.b16 %v342
      %v785 = vunpack.c.l.b16 %v343
      %v786 = vunpack.c.l.b16 %v344
      %v787 = vunpack.c.l.b16 %v345
      %v788 = vunpack.c.l.b16 %v346
      %v789 = vunpack.c.l.b16 %v347
      %v790 = vpack.c.b16 %v775, %v774
      %v791 = vpack.c.b16 %v777, %v776
      %v792 = vpack.c.b16 %v779, %v778
      %v793 = vpack.c.b16 %v781, %v780
      %v794 = vpack.c.b16 %v783, %v782
      %v795 = vpack.c.b16 %v785, %v784
      %v796 = vpack.c.b16 %v787, %v786
      %v797 = vpack.c.b16 %v789, %v788
      %806 = vmatprep.subr.bf16.mxu0 0
      %807 = vmatpush1.bf16.msra.mxu0 %v790
      %808 = vmatprep.subr.bf16.mxu0 0
      %809 = vmatpush1.bf16.msra.mxu0 %v791
      %810 = vmatprep.subr.bf16.mxu0 0
      %811 = vmatpush1.bf16.msra.mxu0 %v792
      %812 = vmatprep.subr.bf16.mxu0 0
      %813 = vmatpush1.bf16.msra.mxu0 %v793
      %814 = vmatprep.subr.bf16.mxu0 0
      %815 = vmatpush1.bf16.msra.mxu0 %v794
      %816 = vmatprep.subr.bf16.mxu0 0
      %817 = vmatpush1.bf16.msra.mxu0 %v795
      %818 = vmatprep.subr.bf16.mxu0 0
      %819 = vmatpush1.bf16.msra.mxu0 %v796
      %820 = vmatprep.subr.bf16.mxu0 0
      %821 = vmatpush1.bf16.msra.mxu0 %v797
      %822 = vmatprep.subr.bf16.mxu0 0
      %823 = vmatpush1.bf16.msra.mxu0 0
      %824 = vmatprep.subr.bf16.mxu0 0
      %825 = vmatpush1.bf16.msra.mxu0 0
      %826 = vmatprep.subr.bf16.mxu0 0
      %827 = vmatpush1.bf16.msra.mxu0 0
      %828 = vmatprep.subr.bf16.mxu0 0
      %829 = vmatpush1.bf16.msra.mxu0 0
      %830 = vmatprep.subr.bf16.mxu0 0
      %831 = vmatpush1.bf16.msra.mxu0 0
      %832 = vmatprep.subr.bf16.mxu0 0
      %833 = vmatpush1.bf16.msra.mxu0 0
      %834 = vmatprep.subr.bf16.mxu0 0
      %835 = vmatpush1.bf16.msra.mxu0 0
      %836 = vmatprep.subr.bf16.mxu0 0
      %837 = vmatpush1.bf16.msra.mxu0 0
      %838 = vmatprep.mubr.bf16.mxu0 0
      %839 = vmatmul.mubr.bf16.gmra.mrb[0].mxu0 %v668
      %v840 = vpop.f32.mrb[0].mxu0
      %v841 = vadd.f32 %v753, %v840
      %v842 = vpop.f32.mrb[0].mxu0
      %v843 = vpop.f32.mrb[0].mxu0
      %v844 = vpop.f32.mrb[0].mxu0
      %845 = vdwg.mxu0
      %v846 = vadd.f32 %v841, %v364
      %v847 = vlaneseq
      %v848 = vshrl.u32 %v847, 7
      %v849 = vsub.s32 0, %v848
      %v850 = vrot.slane %v846, %v849
      %v851 = vadd.f32 %v609, %v850
      %v852 = vadd.f32 %v611, %v850
      %v853 = vadd.f32 %v613, %v850
      %v854 = vadd.f32 %v615, %v850
      %v855 = vadd.f32 %v617, %v850
      %v856 = vadd.f32 %v619, %v850
      %v857 = vadd.f32 %v621, %v850
      %v858 = vadd.f32 %v623, %v850
      %v859 = vadd.f32 %v625, %v850
      %v860 = vadd.f32 %v627, %v850
      %v861 = vadd.f32 %v629, %v850
      %v862 = vpack.c.bf16 %v852, %v851
      %v863 = vpack.c.bf16 %v854, %v853
      %v864 = vpack.c.bf16 %v856, %v855
      %v865 = vpack.c.bf16 %v858, %v857
      %v866 = vpack.c.bf16 %v860, %v859
      %v867 = vpack.c.bf16 %v861, %v861
      %v869 = vlaneseq
      %v870 = vshrl.u32 %v869, 7
      %v871 = vsub.s32 0, %v870
      %v872 = vrot.slane %v381, %v871
      %v890 = vunpack.c.l.b16 %v365
      %v891 = vunpack.c.l.b16 %v366
      %v892 = vunpack.c.l.b16 %v367
      %v893 = vunpack.c.l.b16 %v368
      %v894 = vunpack.c.l.b16 %v369
      %v895 = vunpack.c.l.b16 %v370
      %v896 = vunpack.c.l.b16 %v371
      %v897 = vunpack.c.l.b16 %v372
      %v898 = vunpack.c.l.b16 %v373
      %v899 = vunpack.c.l.b16 %v374
      %v900 = vunpack.c.l.b16 %v375
      %v901 = vunpack.c.l.b16 %v376
      %v902 = vunpack.c.l.b16 %v377
      %v903 = vunpack.c.l.b16 %v378
      %v904 = vunpack.c.l.b16 %v379
      %v905 = vunpack.c.l.b16 %v380
      %v906 = vpack.c.b16 %v891, %v890
      %v907 = vpack.c.b16 %v893, %v892
      %v908 = vpack.c.b16 %v895, %v894
      %v909 = vpack.c.b16 %v897, %v896
      %v910 = vpack.c.b16 %v899, %v898
      %v911 = vpack.c.b16 %v901, %v900
      %v912 = vpack.c.b16 %v903, %v902
      %v913 = vpack.c.b16 %v905, %v904
      %922 = vmatprep.subr.bf16.mxu0 0
      %923 = vmatpush1.bf16.msra.mxu0 %v906
      %924 = vmatprep.subr.bf16.mxu0 0
      %925 = vmatpush1.bf16.msra.mxu0 %v907
      %926 = vmatprep.subr.bf16.mxu0 0
      %927 = vmatpush1.bf16.msra.mxu0 %v908
      %928 = vmatprep.subr.bf16.mxu0 0
      %929 = vmatpush1.bf16.msra.mxu0 %v909
      %930 = vmatprep.subr.bf16.mxu0 0
      %931 = vmatpush1.bf16.msra.mxu0 %v910
      %932 = vmatprep.subr.bf16.mxu0 0
      %933 = vmatpush1.bf16.msra.mxu0 %v911
      %934 = vmatprep.subr.bf16.mxu0 0
      %935 = vmatpush1.bf16.msra.mxu0 %v912
      %936 = vmatprep.subr.bf16.mxu0 0
      %937 = vmatpush1.bf16.msra.mxu0 %v913
      %938 = vmatprep.subr.bf16.mxu0 0
      %939 = vmatpush1.bf16.msra.mxu0 0
      %940 = vmatprep.subr.bf16.mxu0 0
      %941 = vmatpush1.bf16.msra.mxu0 0
      %942 = vmatprep.subr.bf16.mxu0 0
      %943 = vmatpush1.bf16.msra.mxu0 0
      %944 = vmatprep.subr.bf16.mxu0 0
      %945 = vmatpush1.bf16.msra.mxu0 0
      %946 = vmatprep.subr.bf16.mxu0 0
      %947 = vmatpush1.bf16.msra.mxu0 0
      %948 = vmatprep.subr.bf16.mxu0 0
      %949 = vmatpush1.bf16.msra.mxu0 0
      %950 = vmatprep.subr.bf16.mxu0 0
      %951 = vmatpush1.bf16.msra.mxu0 0
      %952 = vmatprep.subr.bf16.mxu0 0
      %953 = vmatpush1.bf16.msra.mxu0 0
      %954 = vmatprep.mubr.bf16.mxu0 0
      %955 = vmatmul.mubr.bf16.gmra.mrb[0].mxu0 %v862
      %v956 = vpop.f32.mrb[0].mxu0
      %v957 = vadd.f32 %v872, %v956
      %v958 = vpop.f32.mrb[0].mxu0
      %v959 = vpop.f32.mrb[0].mxu0
      %v960 = vadd.f32 %v872, %v959
      %v961 = vpop.f32.mrb[0].mxu0
      %962 = vmatprep.mubr.bf16.mxu0 0
      %963 = vmatmul.mubr.bf16.gmra.mrb[0].mxu0 %v863
      %v964 = vpop.f32.mrb[0].mxu0
      %v965 = vadd.f32 %v872, %v964
      %v966 = vpop.f32.mrb[0].mxu0
      %v967 = vpop.f32.mrb[0].mxu0
      %v968 = vadd.f32 %v872, %v967
      %v969 = vpop.f32.mrb[0].mxu0
      %970 = vmatprep.mubr.bf16.mxu0 0
      %971 = vmatmul.mubr.bf16.gmra.mrb[0].mxu0 %v864
      %v972 = vpop.f32.mrb[0].mxu0
      %v973 = vadd.f32 %v872, %v972
      %v974 = vpop.f32.mrb[0].mxu0
      %v975 = vpop.f32.mrb[0].mxu0
      %v976 = vadd.f32 %v872, %v975
      %v977 = vpop.f32.mrb[0].mxu0
      %978 = vmatprep.mubr.bf16.mxu0 0
      %979 = vmatmul.mubr.bf16.gmra.mrb[0].mxu0 %v865
      %v980 = vpop.f32.mrb[0].mxu0
      %v981 = vadd.f32 %v872, %v980
      %v982 = vpop.f32.mrb[0].mxu0
      %v983 = vpop.f32.mrb[0].mxu0
      %v984 = vadd.f32 %v872, %v983
      %v985 = vpop.f32.mrb[0].mxu0
      %986 = vmatprep.mubr.bf16.mxu0 0
      %987 = vmatmul.mubr.bf16.gmra.mrb[0].mxu0 %v866
      %v988 = vpop.f32.mrb[0].mxu0
      %v989 = vadd.f32 %v872, %v988
      %v990 = vpop.f32.mrb[0].mxu0
      %v991 = vpop.f32.mrb[0].mxu0
      %v992 = vadd.f32 %v872, %v991
      %v993 = vpop.f32.mrb[0].mxu0
      %994 = vmatprep.mubr.bf16.mxu0 0
      %995 = vmatmul.mubr.bf16.gmra.mrb[0].mxu0 %v867
      %v996 = vpop.f32.mrb[0].mxu0
      %v997 = vadd.f32 %v872, %v996
      %v998 = vpop.f32.mrb[0].mxu0
      %v999 = vpop.f32.mrb[0].mxu0
      %v1000 = vpop.f32.mrb[0].mxu0
      %1001 = vdwg.mxu0
      %1002 = vst [vmem:[%s312] sm:$0xff] %v957
      %1003 = vst [vmem:[%s312 + $0x8] sm:$0xff] %v960
      %1004 = vst [vmem:[%s312 + $0x10] sm:$0xff] %v965
      %1005 = vst [vmem:[%s312 + $0x18] sm:$0xff] %v968
      %1006 = vst [vmem:[%s312 + $0x20] sm:$0xff] %v973
      %1007 = vst [vmem:[%s312 + $0x28] sm:$0xff] %v976
      %1008 = vst [vmem:[%s312 + $0x30] sm:$0xff] %v981
      %1009 = vst [vmem:[%s312 + $0x38] sm:$0xff] %v984
      %1010 = vst [vmem:[%s312 + $0x40] sm:$0xff] %v989
      %1011 = vst [vmem:[%s312 + $0x48] sm:$0xff] %v992
      %1012 = vst [vmem:[%s312 + $0x50] sm:$0x1] %v997
      %s1013 = scalar_lea.vmem %s305, 44
      %v1014 = vld [vmem:[%s1013] sm:$0xf]
      %v1015 = vld [vmem:[%s1013 + $0x4] sm:$0xf]
      %v1016 = vld [vmem:[%s1013 + $0x8] sm:$0xf]
      %v1017 = vld [vmem:[%s1013 + $0xc] sm:$0xf]
      %v1018 = vld [vmem:[%s1013 + $0x10] sm:$0xf]
      %v1019 = vld [vmem:[%s1013 + $0x14] sm:$0xf]
      %v1020 = vld [vmem:[%s1013 + $0x18] sm:$0xf]
      %v1021 = vld [vmem:[%s1013 + $0x1c] sm:$0xf]
      %v1022 = vld [vmem:[%s1013 + $0x20] sm:$0xf]
      %v1023 = vld [vmem:[%s1013 + $0x24] sm:$0xf]
      %v1024 = vld [vmem:[%s1013 + $0x28] sm:$0x1]
      %v1036 = vunpack.c.l.b16 %v1014
      %v1037 = vunpack.c.l.b16 %v1015
      %v1038 = vunpack.c.l.b16 %v1016
      %v1039 = vunpack.c.l.b16 %v1017
      %v1040 = vunpack.c.l.b16 %v1018
      %v1041 = vunpack.c.l.b16 %v1019
      %v1042 = vunpack.c.l.b16 %v1020
      %v1043 = vunpack.c.l.b16 %v1021
      %v1044 = vunpack.c.l.b16 %v1022
      %v1045 = vunpack.c.l.b16 %v1023
      %v1046 = vunpack.c.l.b16 %v1024
      %v1047 = vpack.c.b16 %v1037, %v1036
      %v1048 = vpack.c.b16 %v1039, %v1038
      %v1049 = vpack.c.b16 %v1041, %v1040
      %v1050 = vpack.c.b16 %v1043, %v1042
      %v1051 = vpack.c.b16 %v1045, %v1044
      %v1052 = vpack.c.b16 %v1046, %v1046
      %1059 = vmatprep.subr.bf16.mxu0 %v487
      %1060 = vmatpush1.bf16.msra.mxu0 %v486
      %1061 = vmatprep.subr.bf16.mxu0 %v489
      %1062 = vmatpush1.bf16.msra.mxu0 %v488
      %1063 = vmatprep.subr.bf16.mxu0 %v491
      %1064 = vmatpush1.bf16.msra.mxu0 %v490
      %1065 = vmatprep.subr.bf16.mxu0 %v493
      %1066 = vmatpush1.bf16.msra.mxu0 %v492
      %1067 = vmatprep.subr.bf16.mxu0 %v495
      %1068 = vmatpush1.bf16.msra.mxu0 %v494
      %1069 = vmatprep.subr.bf16.mxu0 %v497
      %1070 = vmatpush1.bf16.msra.mxu0 %v496
      %1071 = vmatprep.subr.bf16.mxu0 %v499
      %1072 = vmatpush1.bf16.msra.mxu0 %v498
      %1073 = vmatprep.subr.bf16.mxu0 %v501
      %1074 = vmatpush1.bf16.msra.mxu0 %v500
      %1075 = vmatprep.subr.bf16.mxu0 0
      %1076 = vmatpush1.bf16.msra.mxu0 0
      %1077 = vmatprep.subr.bf16.mxu0 0
      %1078 = vmatpush1.bf16.msra.mxu0 0
      %1079 = vmatprep.subr.bf16.mxu0 0
      %1080 = vmatpush1.bf16.msra.mxu0 0
      %1081 = vmatprep.subr.bf16.mxu0 0
      %1082 = vmatpush1.bf16.msra.mxu0 0
      %1083 = vmatprep.subr.bf16.mxu0 0
      %1084 = vmatpush1.bf16.msra.mxu0 0
      %1085 = vmatprep.subr.bf16.mxu0 0
      %1086 = vmatpush1.bf16.msra.mxu0 0
      %1087 = vmatprep.subr.bf16.mxu0 0
      %1088 = vmatpush1.bf16.msra.mxu0 0
      %1089 = vmatprep.subr.bf16.mxu0 0
      %1090 = vmatpush1.bf16.msra.mxu0 0
      %1091 = vmatprep.mubr.bf16.mxu0 0
      %1092 = vmatmul.mubr.bf16.gmra.mrb[0].mxu0 %v1047
      %v1093 = vpop.f32.mrb[0].mxu0
      %v1094 = vadd.f32 %v397, %v1093
      %v1095 = vpop.f32.mrb[0].mxu0
      %v1096 = vadd.f32 %v401, %v1095
      %v1097 = vpop.f32.mrb[0].mxu0
      %v1098 = vadd.f32 %v397, %v1097
      %v1099 = vpop.f32.mrb[0].mxu0
      %v1100 = vadd.f32 %v401, %v1099
      %1101 = vmatprep.mubr.bf16.mxu0 0
      %1102 = vmatmul.mubr.bf16.gmra.mrb[0].mxu0 %v1048
      %v1103 = vpop.f32.mrb[0].mxu0
      %v1104 = vadd.f32 %v397, %v1103
      %v1105 = vpop.f32.mrb[0].mxu0
      %v1106 = vadd.f32 %v401, %v1105
      %v1107 = vpop.f32.mrb[0].mxu0
      %v1108 = vadd.f32 %v397, %v1107
      %v1109 = vpop.f32.mrb[0].mxu0
      %v1110 = vadd.f32 %v401, %v1109
      %1111 = vmatprep.mubr.bf16.mxu0 0
      %1112 = vmatmul.mubr.bf16.gmra.mrb[0].mxu0 %v1049
      %v1113 = vpop.f32.mrb[0].mxu0
      %v1114 = vadd.f32 %v397, %v1113
      %v1115 = vpop.f32.mrb[0].mxu0
      %v1116 = vadd.f32 %v401, %v1115
      %v1117 = vpop.f32.mrb[0].mxu0
      %v1118 = vadd.f32 %v397, %v1117
      %v1119 = vpop.f32.mrb[0].mxu0
      %v1120 = vadd.f32 %v401, %v1119
      %1121 = vmatprep.mubr.bf16.mxu0 0
      %1122 = vmatmul.mubr.bf16.gmra.mrb[0].mxu0 %v1050
      %v1123 = vpop.f32.mrb[0].mxu0
      %v1124 = vadd.f32 %v397, %v1123
      %v1125 = vpop.f32.mrb[0].mxu0
      %v1126 = vadd.f32 %v401, %v1125
      %v1127 = vpop.f32.mrb[0].mxu0
      %v1128 = vadd.f32 %v397, %v1127
      %v1129 = vpop.f32.mrb[0].mxu0
      %v1130 = vadd.f32 %v401, %v1129
      %1131 = vmatprep.mubr.bf16.mxu0 0
      %1132 = vmatmul.mubr.bf16.gmra.mrb[0].mxu0 %v1051
      %v1133 = vpop.f32.mrb[0].mxu0
      %v1134 = vadd.f32 %v397, %v1133
      %v1135 = vpop.f32.mrb[0].mxu0
      %v1136 = vadd.f32 %v401, %v1135
      %v1137 = vpop.f32.mrb[0].mxu0
      %v1138 = vadd.f32 %v397, %v1137
      %v1139 = vpop.f32.mrb[0].mxu0
      %v1140 = vadd.f32 %v401, %v1139
      %1141 = vmatprep.mubr.bf16.mxu0 0
      %1142 = vmatmul.mubr.bf16.gmra.mrb[0].mxu0 %v1052
      %v1143 = vpop.f32.mrb[0].mxu0
      %v1144 = vadd.f32 %v397, %v1143
      %v1145 = vpop.f32.mrb[0].mxu0
      %v1146 = vadd.f32 %v401, %v1145
      %v1147 = vpop.f32.mrb[0].mxu0
      %v1148 = vpop.f32.mrb[0].mxu0
      %1149 = vdwg.mxu0
      %v1150 = vmax.f32 %v1094, 0.0
      %v1151 = vmax.f32 %v1096, 0.0
      %v1152 = vmax.f32 %v1098, 0.0
      %v1153 = vmax.f32 %v1100, 0.0
      %v1154 = vmax.f32 %v1104, 0.0
      %v1155 = vmax.f32 %v1106, 0.0
      %v1156 = vmax.f32 %v1108, 0.0
      %v1157 = vmax.f32 %v1110, 0.0
      %v1158 = vmax.f32 %v1114, 0.0
      %v1159 = vmax.f32 %v1116, 0.0
      %v1160 = vmax.f32 %v1118, 0.0
      %v1161 = vmax.f32 %v1120, 0.0
      %v1162 = vmax.f32 %v1124, 0.0
      %v1163 = vmax.f32 %v1126, 0.0
      %v1164 = vmax.f32 %v1128, 0.0
      %v1165 = vmax.f32 %v1130, 0.0
      %v1166 = vmax.f32 %v1134, 0.0
      %v1167 = vmax.f32 %v1136, 0.0
      %v1168 = vmax.f32 %v1138, 0.0
      %v1169 = vmax.f32 %v1140, 0.0
      %v1170 = vmax.f32 %v1144, 0.0
      %v1171 = vmax.f32 %v1146, 0.0
      %v1172 = vmax.f32 %v1151, %v1159
      %v1173 = vmax.f32 %v1153, %v1161
      %v1174 = vmax.f32 %v1155, %v1163
      %v1175 = vmax.f32 %v1157, %v1165
      %v1176 = vmax.f32 %v1172, %v1167
      %v1177 = vmax.f32 %v1173, %v1169
      %v1178 = vsel %vm637, %v1171, -inf
      %v1179 = vmax.f32 %v1174, %v1178
      %v1180 = vmax.f32 %v1176, %v1177
      %v1181 = vmax.f32 %v1179, %v1175
      %v1182 = vmax.f32 %v1180, %v1181
      %v1183 = vrot.slane %v1182, 4
      %v1184 = vmax.f32 %v1182, %v1183
      %v1185 = vrot.slane %v1184, 2
      %v1186 = vmax.f32 %v1184, %v1185
      %v1187 = vrot.slane %v1186, 1
      %v1188 = vmax.f32 %v1186, %v1187
      %v1189 = vadd.f32 %v1151, %v1153
      %v1190 = vadd.f32 %v1189, %v1155
      %v1191 = vadd.f32 %v1190, %v1157
      %v1192 = vadd.f32 %v1191, %v1159
      %v1193 = vadd.f32 %v1192, %v1161
      %v1194 = vadd.f32 %v1193, %v1163
      %v1195 = vadd.f32 %v1194, %v1165
      %v1196 = vadd.f32 %v1195, %v1167
      %v1197 = vadd.f32 %v1196, %v1169
      %v1198 = vsel %vm637, %v1171, 0.0
      %v1199 = vadd.f32 %v1197, %v1198
      %v1200 = vrot.slane %v1199, 4
      %v1201 = vadd.f32 %v1199, %v1200
      %v1202 = vrot.slane %v1201, 2
      %v1203 = vadd.f32 %v1201, %v1202
      %v1204 = vrot.slane %v1203, 1
      %v1205 = vadd.f32 %v1203, %v1204
      %v1206 = vmul.f32 %v1205, %v666
      %v1207 = vpack.c.bf16 %v1188, %v1188
      %v1208 = vpack.c.bf16 %v1206, %v1206
      %1209 = vmatprep.subr.bf16.mxu0 0
      %1210 = vmatpush1.bf16.msra.mxu0 %v702
      %1211 = vmatprep.subr.bf16.mxu0 0
      %1212 = vmatpush1.bf16.msra.mxu0 %v703
      %1213 = vmatprep.subr.bf16.mxu0 0
      %1214 = vmatpush1.bf16.msra.mxu0 %v704
      %1215 = vmatprep.subr.bf16.mxu0 0
      %1216 = vmatpush1.bf16.msra.mxu0 %v705
      %1217 = vmatprep.subr.bf16.mxu0 0
      %1218 = vmatpush1.bf16.msra.mxu0 %v706
      %1219 = vmatprep.subr.bf16.mxu0 0
      %1220 = vmatpush1.bf16.msra.mxu0 %v707
      %1221 = vmatprep.subr.bf16.mxu0 0
      %1222 = vmatpush1.bf16.msra.mxu0 %v708
      %1223 = vmatprep.subr.bf16.mxu0 0
      %1224 = vmatpush1.bf16.msra.mxu0 %v709
      %1225 = vmatprep.subr.bf16.mxu0 0
      %1226 = vmatpush1.bf16.msra.mxu0 0
      %1227 = vmatprep.subr.bf16.mxu0 0
      %1228 = vmatpush1.bf16.msra.mxu0 0
      %1229 = vmatprep.subr.bf16.mxu0 0
      %1230 = vmatpush1.bf16.msra.mxu0 0
      %1231 = vmatprep.subr.bf16.mxu0 0
      %1232 = vmatpush1.bf16.msra.mxu0 0
      %1233 = vmatprep.subr.bf16.mxu0 0
      %1234 = vmatpush1.bf16.msra.mxu0 0
      %1235 = vmatprep.subr.bf16.mxu0 0
      %1236 = vmatpush1.bf16.msra.mxu0 0
      %1237 = vmatprep.subr.bf16.mxu0 0
      %1238 = vmatpush1.bf16.msra.mxu0 0
      %1239 = vmatprep.subr.bf16.mxu0 0
      %1240 = vmatpush1.bf16.msra.mxu0 0
      %1241 = vmatprep.mubr.bf16.mxu0 0
      %1242 = vmatmul.mubr.bf16.gmra.mrb[0].mxu0 %v1208
      %v1243 = vpop.f32.mrb[0].mxu0
      %v1244 = vadd.f32 0.0, %v1243
      %v1245 = vpop.f32.mrb[0].mxu0
      %v1246 = vpop.f32.mrb[0].mxu0
      %v1247 = vpop.f32.mrb[0].mxu0
      %1248 = vdwg.mxu0
      %1249 = vmatprep.subr.bf16.mxu0 0
      %1250 = vmatpush1.bf16.msra.mxu0 %v790
      %1251 = vmatprep.subr.bf16.mxu0 0
      %1252 = vmatpush1.bf16.msra.mxu0 %v791
      %1253 = vmatprep.subr.bf16.mxu0 0
      %1254 = vmatpush1.bf16.msra.mxu0 %v792
      %1255 = vmatprep.subr.bf16.mxu0 0
      %1256 = vmatpush1.bf16.msra.mxu0 %v793
      %1257 = vmatprep.subr.bf16.mxu0 0
      %1258 = vmatpush1.bf16.msra.mxu0 %v794
      %1259 = vmatprep.subr.bf16.mxu0 0
      %1260 = vmatpush1.bf16.msra.mxu0 %v795
      %1261 = vmatprep.subr.bf16.mxu0 0
      %1262 = vmatpush1.bf16.msra.mxu0 %v796
      %1263 = vmatprep.subr.bf16.mxu0 0
      %1264 = vmatpush1.bf16.msra.mxu0 %v797
      %1265 = vmatprep.subr.bf16.mxu0 0
      %1266 = vmatpush1.bf16.msra.mxu0 0
      %1267 = vmatprep.subr.bf16.mxu0 0
      %1268 = vmatpush1.bf16.msra.mxu0 0
      %1269 = vmatprep.subr.bf16.mxu0 0
      %1270 = vmatpush1.bf16.msra.mxu0 0
      %1271 = vmatprep.subr.bf16.mxu0 0
      %1272 = vmatpush1.bf16.msra.mxu0 0
      %1273 = vmatprep.subr.bf16.mxu0 0
      %1274 = vmatpush1.bf16.msra.mxu0 0
      %1275 = vmatprep.subr.bf16.mxu0 0
      %1276 = vmatpush1.bf16.msra.mxu0 0
      %1277 = vmatprep.subr.bf16.mxu0 0
      %1278 = vmatpush1.bf16.msra.mxu0 0
      %1279 = vmatprep.subr.bf16.mxu0 0
      %1280 = vmatpush1.bf16.msra.mxu0 0
      %1281 = vmatprep.mubr.bf16.mxu0 0
      %1282 = vmatmul.mubr.bf16.gmra.mrb[0].mxu0 %v1207
      %v1283 = vpop.f32.mrb[0].mxu0
      %v1284 = vadd.f32 %v1244, %v1283
      %v1285 = vpop.f32.mrb[0].mxu0
      %v1286 = vpop.f32.mrb[0].mxu0
      %v1287 = vpop.f32.mrb[0].mxu0
      %1288 = vdwg.mxu0
      %v1289 = vadd.f32 %v1284, %v364
      %v1290 = vlaneseq
      %v1291 = vshrl.u32 %v1290, 7
      %v1292 = vsub.s32 0, %v1291
      %v1293 = vrot.slane %v1289, %v1292
      %v1294 = vadd.f32 %v1150, %v1293
      %v1295 = vadd.f32 %v1152, %v1293
      %v1296 = vadd.f32 %v1154, %v1293
      %v1297 = vadd.f32 %v1156, %v1293
      %v1298 = vadd.f32 %v1158, %v1293
      %v1299 = vadd.f32 %v1160, %v1293
      %v1300 = vadd.f32 %v1162, %v1293
      %v1301 = vadd.f32 %v1164, %v1293
      %v1302 = vadd.f32 %v1166, %v1293
      %v1303 = vadd.f32 %v1168, %v1293
      %v1304 = vadd.f32 %v1170, %v1293
      %v1305 = vpack.c.bf16 %v1295, %v1294
      %v1306 = vpack.c.bf16 %v1297, %v1296
      %v1307 = vpack.c.bf16 %v1299, %v1298
      %v1308 = vpack.c.bf16 %v1301, %v1300
      %v1309 = vpack.c.bf16 %v1303, %v1302
      %v1310 = vpack.c.bf16 %v1304, %v1304
      %1311 = vmatprep.subr.bf16.mxu0 0
      %1312 = vmatpush1.bf16.msra.mxu0 %v906
      %1313 = vmatprep.subr.bf16.mxu0 0
      %1314 = vmatpush1.bf16.msra.mxu0 %v907
      %1315 = vmatprep.subr.bf16.mxu0 0
      %1316 = vmatpush1.bf16.msra.mxu0 %v908
      %1317 = vmatprep.subr.bf16.mxu0 0
      %1318 = vmatpush1.bf16.msra.mxu0 %v909
      %1319 = vmatprep.subr.bf16.mxu0 0
      %1320 = vmatpush1.bf16.msra.mxu0 %v910
      %1321 = vmatprep.subr.bf16.mxu0 0
      %1322 = vmatpush1.bf16.msra.mxu0 %v911
      %1323 = vmatprep.subr.bf16.mxu0 0
      %1324 = vmatpush1.bf16.msra.mxu0 %v912
      %1325 = vmatprep.subr.bf16.mxu0 0
      %1326 = vmatpush1.bf16.msra.mxu0 %v913
      %1327 = vmatprep.subr.bf16.mxu0 0
      %1328 = vmatpush1.bf16.msra.mxu0 0
      %1329 = vmatprep.subr.bf16.mxu0 0
      %1330 = vmatpush1.bf16.msra.mxu0 0
      %1331 = vmatprep.subr.bf16.mxu0 0
      %1332 = vmatpush1.bf16.msra.mxu0 0
      %1333 = vmatprep.subr.bf16.mxu0 0
      %1334 = vmatpush1.bf16.msra.mxu0 0
      %1335 = vmatprep.subr.bf16.mxu0 0
      %1336 = vmatpush1.bf16.msra.mxu0 0
      %1337 = vmatprep.subr.bf16.mxu0 0
      %1338 = vmatpush1.bf16.msra.mxu0 0
      %1339 = vmatprep.subr.bf16.mxu0 0
      %1340 = vmatpush1.bf16.msra.mxu0 0
      %1341 = vmatprep.subr.bf16.mxu0 0
      %1342 = vmatpush1.bf16.msra.mxu0 0
      %1343 = vmatprep.mubr.bf16.mxu0 0
      %1344 = vmatmul.mubr.bf16.gmra.mrb[0].mxu0 %v1305
      %v1345 = vpop.f32.mrb[0].mxu0
      %v1346 = vadd.f32 %v872, %v1345
      %v1347 = vpop.f32.mrb[0].mxu0
      %v1348 = vpop.f32.mrb[0].mxu0
      %v1349 = vadd.f32 %v872, %v1348
      %v1350 = vpop.f32.mrb[0].mxu0
      %1351 = vmatprep.mubr.bf16.mxu0 0
      %1352 = vmatmul.mubr.bf16.gmra.mrb[0].mxu0 %v1306
      %v1353 = vpop.f32.mrb[0].mxu0
      %v1354 = vadd.f32 %v872, %v1353
      %v1355 = vpop.f32.mrb[0].mxu0
      %v1356 = vpop.f32.mrb[0].mxu0
      %v1357 = vadd.f32 %v872, %v1356
      %v1358 = vpop.f32.mrb[0].mxu0
      %1359 = vmatprep.mubr.bf16.mxu0 0
      %1360 = vmatmul.mubr.bf16.gmra.mrb[0].mxu0 %v1307
      %v1361 = vpop.f32.mrb[0].mxu0
      %v1362 = vadd.f32 %v872, %v1361
      %v1363 = vpop.f32.mrb[0].mxu0
      %v1364 = vpop.f32.mrb[0].mxu0
      %v1365 = vadd.f32 %v872, %v1364
      %v1366 = vpop.f32.mrb[0].mxu0
      %1367 = vmatprep.mubr.bf16.mxu0 0
      %1368 = vmatmul.mubr.bf16.gmra.mrb[0].mxu0 %v1308
      %v1369 = vpop.f32.mrb[0].mxu0
      %v1370 = vadd.f32 %v872, %v1369
      %v1371 = vpop.f32.mrb[0].mxu0
      %v1372 = vpop.f32.mrb[0].mxu0
      %v1373 = vadd.f32 %v872, %v1372
      %v1374 = vpop.f32.mrb[0].mxu0
      %1375 = vmatprep.mubr.bf16.mxu0 0
      %1376 = vmatmul.mubr.bf16.gmra.mrb[0].mxu0 %v1309
      %v1377 = vpop.f32.mrb[0].mxu0
      %v1378 = vadd.f32 %v872, %v1377
      %v1379 = vpop.f32.mrb[0].mxu0
      %v1380 = vpop.f32.mrb[0].mxu0
      %v1381 = vadd.f32 %v872, %v1380
      %v1382 = vpop.f32.mrb[0].mxu0
      %1383 = vmatprep.mubr.bf16.mxu0 0
      %1384 = vmatmul.mubr.bf16.gmra.mrb[0].mxu0 %v1310
      %v1385 = vpop.f32.mrb[0].mxu0
      %v1386 = vadd.f32 %v872, %v1385
      %v1387 = vpop.f32.mrb[0].mxu0
      %v1388 = vpop.f32.mrb[0].mxu0
      %v1389 = vpop.f32.mrb[0].mxu0
      %1390 = vdwg.mxu0
      %s1391 = scalar_lea.vmem %s312, 88
      %1392 = vst [vmem:[%s1391] sm:$0xff] %v1346
      %1393 = vst [vmem:[%s1391 + $0x8] sm:$0xff] %v1349
      %1394 = vst [vmem:[%s1391 + $0x10] sm:$0xff] %v1354
      %1395 = vst [vmem:[%s1391 + $0x18] sm:$0xff] %v1357
      %1396 = vst [vmem:[%s1391 + $0x20] sm:$0xff] %v1362
      %1397 = vst [vmem:[%s1391 + $0x28] sm:$0xff] %v1365
      %1398 = vst [vmem:[%s1391 + $0x30] sm:$0xff] %v1370
      %1399 = vst [vmem:[%s1391 + $0x38] sm:$0xff] %v1373
      %1400 = vst [vmem:[%s1391 + $0x40] sm:$0xff] %v1378
      %1401 = vst [vmem:[%s1391 + $0x48] sm:$0xff] %v1381
      %1402 = vst [vmem:[%s1391 + $0x50] sm:$0x1] %v1386
      %s1403 = scalar_lea.vmem %s305, 88
      %v1404 = vld [vmem:[%s1403] sm:$0xf]
      %v1405 = vld [vmem:[%s1403 + $0x4] sm:$0xf]
      %v1406 = vld [vmem:[%s1403 + $0x8] sm:$0xf]
      %v1407 = vld [vmem:[%s1403 + $0xc] sm:$0xf]
      %v1408 = vld [vmem:[%s1403 + $0x10] sm:$0xf]
      %v1409 = vld [vmem:[%s1403 + $0x14] sm:$0xf]
      %v1410 = vld [vmem:[%s1403 + $0x18] sm:$0xf]
      %v1411 = vld [vmem:[%s1403 + $0x1c] sm:$0xf]
      %v1412 = vld [vmem:[%s1403 + $0x20] sm:$0xf]
      %v1413 = vld [vmem:[%s1403 + $0x24] sm:$0xf]
      %v1414 = vld [vmem:[%s1403 + $0x28] sm:$0x1]
      %v1426 = vunpack.c.l.b16 %v1404
      %v1427 = vunpack.c.l.b16 %v1405
      %v1428 = vunpack.c.l.b16 %v1406
      %v1429 = vunpack.c.l.b16 %v1407
      %v1430 = vunpack.c.l.b16 %v1408
      %v1431 = vunpack.c.l.b16 %v1409
      %v1432 = vunpack.c.l.b16 %v1410
      %v1433 = vunpack.c.l.b16 %v1411
      %v1434 = vunpack.c.l.b16 %v1412
      %v1435 = vunpack.c.l.b16 %v1413
      %v1436 = vunpack.c.l.b16 %v1414
      %v1437 = vpack.c.b16 %v1427, %v1426
      %v1438 = vpack.c.b16 %v1429, %v1428
      %v1439 = vpack.c.b16 %v1431, %v1430
      %v1440 = vpack.c.b16 %v1433, %v1432
      %v1441 = vpack.c.b16 %v1435, %v1434
      %v1442 = vpack.c.b16 %v1436, %v1436
      %1449 = vmatprep.subr.bf16.mxu0 %v487
      %1450 = vmatpush1.bf16.msra.mxu0 %v486
      %1451 = vmatprep.subr.bf16.mxu0 %v489
      %1452 = vmatpush1.bf16.msra.mxu0 %v488
      %1453 = vmatprep.subr.bf16.mxu0 %v491
      %1454 = vmatpush1.bf16.msra.mxu0 %v490
      %1455 = vmatprep.subr.bf16.mxu0 %v493
      %1456 = vmatpush1.bf16.msra.mxu0 %v492
      %1457 = vmatprep.subr.bf16.mxu0 %v495
      %1458 = vmatpush1.bf16.msra.mxu0 %v494
      %1459 = vmatprep.subr.bf16.mxu0 %v497
      %1460 = vmatpush1.bf16.msra.mxu0 %v496
      %1461 = vmatprep.subr.bf16.mxu0 %v499
      %1462 = vmatpush1.bf16.msra.mxu0 %v498
      %1463 = vmatprep.subr.bf16.mxu0 %v501
      %1464 = vmatpush1.bf16.msra.mxu0 %v500
      %1465 = vmatprep.subr.bf16.mxu0 0
      %1466 = vmatpush1.bf16.msra.mxu0 0
      %1467 = vmatprep.subr.bf16.mxu0 0
      %1468 = vmatpush1.bf16.msra.mxu0 0
      %1469 = vmatprep.subr.bf16.mxu0 0
      %1470 = vmatpush1.bf16.msra.mxu0 0
      %1471 = vmatprep.subr.bf16.mxu0 0
      %1472 = vmatpush1.bf16.msra.mxu0 0
      %1473 = vmatprep.subr.bf16.mxu0 0
      %1474 = vmatpush1.bf16.msra.mxu0 0
      %1475 = vmatprep.subr.bf16.mxu0 0
      %1476 = vmatpush1.bf16.msra.mxu0 0
      %1477 = vmatprep.subr.bf16.mxu0 0
      %1478 = vmatpush1.bf16.msra.mxu0 0
      %1479 = vmatprep.subr.bf16.mxu0 0
      %1480 = vmatpush1.bf16.msra.mxu0 0
      %1481 = vmatprep.mubr.bf16.mxu0 0
      %1482 = vmatmul.mubr.bf16.gmra.mrb[0].mxu0 %v1437
      %v1483 = vpop.f32.mrb[0].mxu0
      %v1484 = vadd.f32 %v397, %v1483
      %v1485 = vpop.f32.mrb[0].mxu0
      %v1486 = vadd.f32 %v401, %v1485
      %v1487 = vpop.f32.mrb[0].mxu0
      %v1488 = vadd.f32 %v397, %v1487
      %v1489 = vpop.f32.mrb[0].mxu0
      %v1490 = vadd.f32 %v401, %v1489
      %1491 = vmatprep.mubr.bf16.mxu0 0
      %1492 = vmatmul.mubr.bf16.gmra.mrb[0].mxu0 %v1438
      %v1493 = vpop.f32.mrb[0].mxu0
      %v1494 = vadd.f32 %v397, %v1493
      %v1495 = vpop.f32.mrb[0].mxu0
      %v1496 = vadd.f32 %v401, %v1495
      %v1497 = vpop.f32.mrb[0].mxu0
      %v1498 = vadd.f32 %v397, %v1497
      %v1499 = vpop.f32.mrb[0].mxu0
      %v1500 = vadd.f32 %v401, %v1499
      %1501 = vmatprep.mubr.bf16.mxu0 0
      %1502 = vmatmul.mubr.bf16.gmra.mrb[0].mxu0 %v1439
      %v1503 = vpop.f32.mrb[0].mxu0
      %v1504 = vadd.f32 %v397, %v1503
      %v1505 = vpop.f32.mrb[0].mxu0
      %v1506 = vadd.f32 %v401, %v1505
      %v1507 = vpop.f32.mrb[0].mxu0
      %v1508 = vadd.f32 %v397, %v1507
      %v1509 = vpop.f32.mrb[0].mxu0
      %v1510 = vadd.f32 %v401, %v1509
      %1511 = vmatprep.mubr.bf16.mxu0 0
      %1512 = vmatmul.mubr.bf16.gmra.mrb[0].mxu0 %v1440
      %v1513 = vpop.f32.mrb[0].mxu0
      %v1514 = vadd.f32 %v397, %v1513
      %v1515 = vpop.f32.mrb[0].mxu0
      %v1516 = vadd.f32 %v401, %v1515
      %v1517 = vpop.f32.mrb[0].mxu0
      %v1518 = vadd.f32 %v397, %v1517
      %v1519 = vpop.f32.mrb[0].mxu0
      %v1520 = vadd.f32 %v401, %v1519
      %1521 = vmatprep.mubr.bf16.mxu0 0
      %1522 = vmatmul.mubr.bf16.gmra.mrb[0].mxu0 %v1441
      %v1523 = vpop.f32.mrb[0].mxu0
      %v1524 = vadd.f32 %v397, %v1523
      %v1525 = vpop.f32.mrb[0].mxu0
      %v1526 = vadd.f32 %v401, %v1525
      %v1527 = vpop.f32.mrb[0].mxu0
      %v1528 = vadd.f32 %v397, %v1527
      %v1529 = vpop.f32.mrb[0].mxu0
      %v1530 = vadd.f32 %v401, %v1529
      %1531 = vmatprep.mubr.bf16.mxu0 0
      %1532 = vmatmul.mubr.bf16.gmra.mrb[0].mxu0 %v1442
      %v1533 = vpop.f32.mrb[0].mxu0
      %v1534 = vadd.f32 %v397, %v1533
      %v1535 = vpop.f32.mrb[0].mxu0
      %v1536 = vadd.f32 %v401, %v1535
      %v1537 = vpop.f32.mrb[0].mxu0
      %v1538 = vpop.f32.mrb[0].mxu0
      %1539 = vdwg.mxu0
      %v1540 = vmax.f32 %v1484, 0.0
      %v1541 = vmax.f32 %v1486, 0.0
      %v1542 = vmax.f32 %v1488, 0.0
      %v1543 = vmax.f32 %v1490, 0.0
      %v1544 = vmax.f32 %v1494, 0.0
      %v1545 = vmax.f32 %v1496, 0.0
      %v1546 = vmax.f32 %v1498, 0.0
      %v1547 = vmax.f32 %v1500, 0.0
      %v1548 = vmax.f32 %v1504, 0.0
      %v1549 = vmax.f32 %v1506, 0.0
      %v1550 = vmax.f32 %v1508, 0.0
      %v1551 = vmax.f32 %v1510, 0.0
      %v1552 = vmax.f32 %v1514, 0.0
      %v1553 = vmax.f32 %v1516, 0.0
      %v1554 = vmax.f32 %v1518, 0.0
      %v1555 = vmax.f32 %v1520, 0.0
      %v1556 = vmax.f32 %v1524, 0.0
      %v1557 = vmax.f32 %v1526, 0.0
      %v1558 = vmax.f32 %v1528, 0.0
      %v1559 = vmax.f32 %v1530, 0.0
      %v1560 = vmax.f32 %v1534, 0.0
      %v1561 = vmax.f32 %v1536, 0.0
      %v1562 = vmax.f32 %v1541, %v1549
      %v1563 = vmax.f32 %v1543, %v1551
      %v1564 = vmax.f32 %v1545, %v1553
      %v1565 = vmax.f32 %v1547, %v1555
      %v1566 = vmax.f32 %v1562, %v1557
      %v1567 = vmax.f32 %v1563, %v1559
      %v1568 = vsel %vm637, %v1561, -inf
      %v1569 = vmax.f32 %v1564, %v1568
      %v1570 = vmax.f32 %v1566, %v1567
      %v1571 = vmax.f32 %v1569, %v1565
      %v1572 = vmax.f32 %v1570, %v1571
      %v1573 = vrot.slane %v1572, 4
      %v1574 = vmax.f32 %v1572, %v1573
      %v1575 = vrot.slane %v1574, 2
      %v1576 = vmax.f32 %v1574, %v1575
      %v1577 = vrot.slane %v1576, 1
      %v1578 = vmax.f32 %v1576, %v1577
      %v1579 = vadd.f32 %v1541, %v1543
      %v1580 = vadd.f32 %v1579, %v1545
      %v1581 = vadd.f32 %v1580, %v1547
      %v1582 = vadd.f32 %v1581, %v1549
      %v1583 = vadd.f32 %v1582, %v1551
      %v1584 = vadd.f32 %v1583, %v1553
      %v1585 = vadd.f32 %v1584, %v1555
      %v1586 = vadd.f32 %v1585, %v1557
      %v1587 = vadd.f32 %v1586, %v1559
      %v1588 = vsel %vm637, %v1561, 0.0
      %v1589 = vadd.f32 %v1587, %v1588
      %v1590 = vrot.slane %v1589, 4
      %v1591 = vadd.f32 %v1589, %v1590
      %v1592 = vrot.slane %v1591, 2
      %v1593 = vadd.f32 %v1591, %v1592
      %v1594 = vrot.slane %v1593, 1
      %v1595 = vadd.f32 %v1593, %v1594
      %v1596 = vmul.f32 %v1595, %v666
      %v1597 = vpack.c.bf16 %v1578, %v1578
      %v1598 = vpack.c.bf16 %v1596, %v1596
      %1599 = vmatprep.subr.bf16.mxu0 0
      %1600 = vmatpush1.bf16.msra.mxu0 %v702
      %1601 = vmatprep.subr.bf16.mxu0 0
      %1602 = vmatpush1.bf16.msra.mxu0 %v703
      %1603 = vmatprep.subr.bf16.mxu0 0
      %1604 = vmatpush1.bf16.msra.mxu0 %v704
      %1605 = vmatprep.subr.bf16.mxu0 0
      %1606 = vmatpush1.bf16.msra.mxu0 %v705
      %1607 = vmatprep.subr.bf16.mxu0 0
      %1608 = vmatpush1.bf16.msra.mxu0 %v706
      %1609 = vmatprep.subr.bf16.mxu0 0
      %1610 = vmatpush1.bf16.msra.mxu0 %v707
      %1611 = vmatprep.subr.bf16.mxu0 0
      %1612 = vmatpush1.bf16.msra.mxu0 %v708
      %1613 = vmatprep.subr.bf16.mxu0 0
      %1614 = vmatpush1.bf16.msra.mxu0 %v709
      %1615 = vmatprep.subr.bf16.mxu0 0
      %1616 = vmatpush1.bf16.msra.mxu0 0
      %1617 = vmatprep.subr.bf16.mxu0 0
      %1618 = vmatpush1.bf16.msra.mxu0 0
      %1619 = vmatprep.subr.bf16.mxu0 0
      %1620 = vmatpush1.bf16.msra.mxu0 0
      %1621 = vmatprep.subr.bf16.mxu0 0
      %1622 = vmatpush1.bf16.msra.mxu0 0
      %1623 = vmatprep.subr.bf16.mxu0 0
      %1624 = vmatpush1.bf16.msra.mxu0 0
      %1625 = vmatprep.subr.bf16.mxu0 0
      %1626 = vmatpush1.bf16.msra.mxu0 0
      %1627 = vmatprep.subr.bf16.mxu0 0
      %1628 = vmatpush1.bf16.msra.mxu0 0
      %1629 = vmatprep.subr.bf16.mxu0 0
      %1630 = vmatpush1.bf16.msra.mxu0 0
      %1631 = vmatprep.mubr.bf16.mxu0 0
      %1632 = vmatmul.mubr.bf16.gmra.mrb[0].mxu0 %v1598
      %v1633 = vpop.f32.mrb[0].mxu0
      %v1634 = vadd.f32 0.0, %v1633
      %v1635 = vpop.f32.mrb[0].mxu0
      %v1636 = vpop.f32.mrb[0].mxu0
      %v1637 = vpop.f32.mrb[0].mxu0
      %1638 = vdwg.mxu0
      %1639 = vmatprep.subr.bf16.mxu0 0
      %1640 = vmatpush1.bf16.msra.mxu0 %v790
      %1641 = vmatprep.subr.bf16.mxu0 0
      %1642 = vmatpush1.bf16.msra.mxu0 %v791
      %1643 = vmatprep.subr.bf16.mxu0 0
      %1644 = vmatpush1.bf16.msra.mxu0 %v792
      %1645 = vmatprep.subr.bf16.mxu0 0
      %1646 = vmatpush1.bf16.msra.mxu0 %v793
      %1647 = vmatprep.subr.bf16.mxu0 0
      %1648 = vmatpush1.bf16.msra.mxu0 %v794
      %1649 = vmatprep.subr.bf16.mxu0 0
      %1650 = vmatpush1.bf16.msra.mxu0 %v795
      %1651 = vmatprep.subr.bf16.mxu0 0
      %1652 = vmatpush1.bf16.msra.mxu0 %v796
      %1653 = vmatprep.subr.bf16.mxu0 0
      %1654 = vmatpush1.bf16.msra.mxu0 %v797
      %1655 = vmatprep.subr.bf16.mxu0 0
      %1656 = vmatpush1.bf16.msra.mxu0 0
      %1657 = vmatprep.subr.bf16.mxu0 0
      %1658 = vmatpush1.bf16.msra.mxu0 0
      %1659 = vmatprep.subr.bf16.mxu0 0
      %1660 = vmatpush1.bf16.msra.mxu0 0
      %1661 = vmatprep.subr.bf16.mxu0 0
      %1662 = vmatpush1.bf16.msra.mxu0 0
      %1663 = vmatprep.subr.bf16.mxu0 0
      %1664 = vmatpush1.bf16.msra.mxu0 0
      %1665 = vmatprep.subr.bf16.mxu0 0
      %1666 = vmatpush1.bf16.msra.mxu0 0
      %1667 = vmatprep.subr.bf16.mxu0 0
      %1668 = vmatpush1.bf16.msra.mxu0 0
      %1669 = vmatprep.subr.bf16.mxu0 0
      %1670 = vmatpush1.bf16.msra.mxu0 0
      %1671 = vmatprep.mubr.bf16.mxu0 0
      %1672 = vmatmul.mubr.bf16.gmra.mrb[0].mxu0 %v1597
      %v1673 = vpop.f32.mrb[0].mxu0
      %v1674 = vadd.f32 %v1634, %v1673
      %v1675 = vpop.f32.mrb[0].mxu0
      %v1676 = vpop.f32.mrb[0].mxu0
      %v1677 = vpop.f32.mrb[0].mxu0
      %1678 = vdwg.mxu0
      %v1679 = vadd.f32 %v1674, %v364
      %v1680 = vlaneseq
      %v1681 = vshrl.u32 %v1680, 7
      %v1682 = vsub.s32 0, %v1681
      %v1683 = vrot.slane %v1679, %v1682
      %v1684 = vadd.f32 %v1540, %v1683
      %v1685 = vadd.f32 %v1542, %v1683
      %v1686 = vadd.f32 %v1544, %v1683
      %v1687 = vadd.f32 %v1546, %v1683
      %v1688 = vadd.f32 %v1548, %v1683
      %v1689 = vadd.f32 %v1550, %v1683
      %v1690 = vadd.f32 %v1552, %v1683
      %v1691 = vadd.f32 %v1554, %v1683
      %v1692 = vadd.f32 %v1556, %v1683
      %v1693 = vadd.f32 %v1558, %v1683
      %v1694 = vadd.f32 %v1560, %v1683
      %v1695 = vpack.c.bf16 %v1685, %v1684
      %v1696 = vpack.c.bf16 %v1687, %v1686
      %v1697 = vpack.c.bf16 %v1689, %v1688
      %v1698 = vpack.c.bf16 %v1691, %v1690
      %v1699 = vpack.c.bf16 %v1693, %v1692
      %v1700 = vpack.c.bf16 %v1694, %v1694
      %1701 = vmatprep.subr.bf16.mxu0 0
      %1702 = vmatpush1.bf16.msra.mxu0 %v906
      %1703 = vmatprep.subr.bf16.mxu0 0
      %1704 = vmatpush1.bf16.msra.mxu0 %v907
      %1705 = vmatprep.subr.bf16.mxu0 0
      %1706 = vmatpush1.bf16.msra.mxu0 %v908
      %1707 = vmatprep.subr.bf16.mxu0 0
      %1708 = vmatpush1.bf16.msra.mxu0 %v909
      %1709 = vmatprep.subr.bf16.mxu0 0
      %1710 = vmatpush1.bf16.msra.mxu0 %v910
      %1711 = vmatprep.subr.bf16.mxu0 0
      %1712 = vmatpush1.bf16.msra.mxu0 %v911
      %1713 = vmatprep.subr.bf16.mxu0 0
      %1714 = vmatpush1.bf16.msra.mxu0 %v912
      %1715 = vmatprep.subr.bf16.mxu0 0
      %1716 = vmatpush1.bf16.msra.mxu0 %v913
      %1717 = vmatprep.subr.bf16.mxu0 0
      %1718 = vmatpush1.bf16.msra.mxu0 0
      %1719 = vmatprep.subr.bf16.mxu0 0
      %1720 = vmatpush1.bf16.msra.mxu0 0
      %1721 = vmatprep.subr.bf16.mxu0 0
      %1722 = vmatpush1.bf16.msra.mxu0 0
      %1723 = vmatprep.subr.bf16.mxu0 0
      %1724 = vmatpush1.bf16.msra.mxu0 0
      %1725 = vmatprep.subr.bf16.mxu0 0
      %1726 = vmatpush1.bf16.msra.mxu0 0
      %1727 = vmatprep.subr.bf16.mxu0 0
      %1728 = vmatpush1.bf16.msra.mxu0 0
      %1729 = vmatprep.subr.bf16.mxu0 0
      %1730 = vmatpush1.bf16.msra.mxu0 0
      %1731 = vmatprep.subr.bf16.mxu0 0
      %1732 = vmatpush1.bf16.msra.mxu0 0
      %1733 = vmatprep.mubr.bf16.mxu0 0
      %1734 = vmatmul.mubr.bf16.gmra.mrb[0].mxu0 %v1695
      %v1735 = vpop.f32.mrb[0].mxu0
      %v1736 = vadd.f32 %v872, %v1735
      %v1737 = vpop.f32.mrb[0].mxu0
      %v1738 = vpop.f32.mrb[0].mxu0
      %v1739 = vadd.f32 %v872, %v1738
      %v1740 = vpop.f32.mrb[0].mxu0
      %1741 = vmatprep.mubr.bf16.mxu0 0
      %1742 = vmatmul.mubr.bf16.gmra.mrb[0].mxu0 %v1696
      %v1743 = vpop.f32.mrb[0].mxu0
      %v1744 = vadd.f32 %v872, %v1743
      %v1745 = vpop.f32.mrb[0].mxu0
      %v1746 = vpop.f32.mrb[0].mxu0
      %v1747 = vadd.f32 %v872, %v1746
      %v1748 = vpop.f32.mrb[0].mxu0
      %1749 = vmatprep.mubr.bf16.mxu0 0
      %1750 = vmatmul.mubr.bf16.gmra.mrb[0].mxu0 %v1697
      %v1751 = vpop.f32.mrb[0].mxu0
      %v1752 = vadd.f32 %v872, %v1751
      %v1753 = vpop.f32.mrb[0].mxu0
      %v1754 = vpop.f32.mrb[0].mxu0
      %v1755 = vadd.f32 %v872, %v1754
      %v1756 = vpop.f32.mrb[0].mxu0
      %1757 = vmatprep.mubr.bf16.mxu0 0
      %1758 = vmatmul.mubr.bf16.gmra.mrb[0].mxu0 %v1698
      %v1759 = vpop.f32.mrb[0].mxu0
      %v1760 = vadd.f32 %v872, %v1759
      %v1761 = vpop.f32.mrb[0].mxu0
      %v1762 = vpop.f32.mrb[0].mxu0
      %v1763 = vadd.f32 %v872, %v1762
      %v1764 = vpop.f32.mrb[0].mxu0
      %1765 = vmatprep.mubr.bf16.mxu0 0
      %1766 = vmatmul.mubr.bf16.gmra.mrb[0].mxu0 %v1699
      %v1767 = vpop.f32.mrb[0].mxu0
      %v1768 = vadd.f32 %v872, %v1767
      %v1769 = vpop.f32.mrb[0].mxu0
      %v1770 = vpop.f32.mrb[0].mxu0
      %v1771 = vadd.f32 %v872, %v1770
      %v1772 = vpop.f32.mrb[0].mxu0
      %1773 = vmatprep.mubr.bf16.mxu0 0
      %1774 = vmatmul.mubr.bf16.gmra.mrb[0].mxu0 %v1700
      %v1775 = vpop.f32.mrb[0].mxu0
      %v1776 = vadd.f32 %v872, %v1775
      %v1777 = vpop.f32.mrb[0].mxu0
      %v1778 = vpop.f32.mrb[0].mxu0
      %v1779 = vpop.f32.mrb[0].mxu0
      %1780 = vdwg.mxu0
      %s1781 = scalar_lea.vmem %s312, 176
      %1782 = vst [vmem:[%s1781] sm:$0xff] %v1736
      %1783 = vst [vmem:[%s1781 + $0x8] sm:$0xff] %v1739
      %1784 = vst [vmem:[%s1781 + $0x10] sm:$0xff] %v1744
      %1785 = vst [vmem:[%s1781 + $0x18] sm:$0xff] %v1747
      %1786 = vst [vmem:[%s1781 + $0x20] sm:$0xff] %v1752
      %1787 = vst [vmem:[%s1781 + $0x28] sm:$0xff] %v1755
      %1788 = vst [vmem:[%s1781 + $0x30] sm:$0xff] %v1760
      %1789 = vst [vmem:[%s1781 + $0x38] sm:$0xff] %v1763
      %1790 = vst [vmem:[%s1781 + $0x40] sm:$0xff] %v1768
      %1791 = vst [vmem:[%s1781 + $0x48] sm:$0xff] %v1771
      %1792 = vst [vmem:[%s1781 + $0x50] sm:$0x1] %v1776
      %s1793 = scalar_lea.vmem %s305, 132
      %v1794 = vld [vmem:[%s1793] sm:$0xf]
      %v1795 = vld [vmem:[%s1793 + $0x4] sm:$0xf]
      %v1796 = vld [vmem:[%s1793 + $0x8] sm:$0xf]
      %v1797 = vld [vmem:[%s1793 + $0xc] sm:$0xf]
      %v1798 = vld [vmem:[%s1793 + $0x10] sm:$0xf]
      %v1799 = vld [vmem:[%s1793 + $0x14] sm:$0xf]
      %v1800 = vld [vmem:[%s1793 + $0x18] sm:$0xf]
      %v1801 = vld [vmem:[%s1793 + $0x1c] sm:$0xf]
      %v1802 = vld [vmem:[%s1793 + $0x20] sm:$0xf]
      %v1803 = vld [vmem:[%s1793 + $0x24] sm:$0xf]
      %v1804 = vld [vmem:[%s1793 + $0x28] sm:$0x1]
      %v1816 = vunpack.c.l.b16 %v1794
      %v1817 = vunpack.c.l.b16 %v1795
      %v1818 = vunpack.c.l.b16 %v1796
      %v1819 = vunpack.c.l.b16 %v1797
      %v1820 = vunpack.c.l.b16 %v1798
      %v1821 = vunpack.c.l.b16 %v1799
      %v1822 = vunpack.c.l.b16 %v1800
      %v1823 = vunpack.c.l.b16 %v1801
      %v1824 = vunpack.c.l.b16 %v1802
      %v1825 = vunpack.c.l.b16 %v1803
      %v1826 = vunpack.c.l.b16 %v1804
      %v1827 = vpack.c.b16 %v1817, %v1816
      %v1828 = vpack.c.b16 %v1819, %v1818
      %v1829 = vpack.c.b16 %v1821, %v1820
      %v1830 = vpack.c.b16 %v1823, %v1822
      %v1831 = vpack.c.b16 %v1825, %v1824
      %v1832 = vpack.c.b16 %v1826, %v1826
      %1839 = vmatprep.subr.bf16.mxu0 %v487
      %1840 = vmatpush1.bf16.msra.mxu0 %v486
      %1841 = vmatprep.subr.bf16.mxu0 %v489
      %1842 = vmatpush1.bf16.msra.mxu0 %v488
      %1843 = vmatprep.subr.bf16.mxu0 %v491
      %1844 = vmatpush1.bf16.msra.mxu0 %v490
      %1845 = vmatprep.subr.bf16.mxu0 %v493
      %1846 = vmatpush1.bf16.msra.mxu0 %v492
      %1847 = vmatprep.subr.bf16.mxu0 %v495
      %1848 = vmatpush1.bf16.msra.mxu0 %v494
      %1849 = vmatprep.subr.bf16.mxu0 %v497
      %1850 = vmatpush1.bf16.msra.mxu0 %v496
      %1851 = vmatprep.subr.bf16.mxu0 %v499
      %1852 = vmatpush1.bf16.msra.mxu0 %v498
      %1853 = vmatprep.subr.bf16.mxu0 %v501
      %1854 = vmatpush1.bf16.msra.mxu0 %v500
      %1855 = vmatprep.subr.bf16.mxu0 0
      %1856 = vmatpush1.bf16.msra.mxu0 0
      %1857 = vmatprep.subr.bf16.mxu0 0
      %1858 = vmatpush1.bf16.msra.mxu0 0
      %1859 = vmatprep.subr.bf16.mxu0 0
      %1860 = vmatpush1.bf16.msra.mxu0 0
      %1861 = vmatprep.subr.bf16.mxu0 0
      %1862 = vmatpush1.bf16.msra.mxu0 0
      %1863 = vmatprep.subr.bf16.mxu0 0
      %1864 = vmatpush1.bf16.msra.mxu0 0
      %1865 = vmatprep.subr.bf16.mxu0 0
      %1866 = vmatpush1.bf16.msra.mxu0 0
      %1867 = vmatprep.subr.bf16.mxu0 0
      %1868 = vmatpush1.bf16.msra.mxu0 0
      %1869 = vmatprep.subr.bf16.mxu0 0
      %1870 = vmatpush1.bf16.msra.mxu0 0
      %1871 = vmatprep.mubr.bf16.mxu0 0
      %1872 = vmatmul.mubr.bf16.gmra.mrb[0].mxu0 %v1827
      %v1873 = vpop.f32.mrb[0].mxu0
      %v1874 = vadd.f32 %v397, %v1873
      %v1875 = vpop.f32.mrb[0].mxu0
      %v1876 = vadd.f32 %v401, %v1875
      %v1877 = vpop.f32.mrb[0].mxu0
      %v1878 = vadd.f32 %v397, %v1877
      %v1879 = vpop.f32.mrb[0].mxu0
      %v1880 = vadd.f32 %v401, %v1879
      %1881 = vmatprep.mubr.bf16.mxu0 0
      %1882 = vmatmul.mubr.bf16.gmra.mrb[0].mxu0 %v1828
      %v1883 = vpop.f32.mrb[0].mxu0
      %v1884 = vadd.f32 %v397, %v1883
      %v1885 = vpop.f32.mrb[0].mxu0
      %v1886 = vadd.f32 %v401, %v1885
      %v1887 = vpop.f32.mrb[0].mxu0
      %v1888 = vadd.f32 %v397, %v1887
      %v1889 = vpop.f32.mrb[0].mxu0
      %v1890 = vadd.f32 %v401, %v1889
      %1891 = vmatprep.mubr.bf16.mxu0 0
      %1892 = vmatmul.mubr.bf16.gmra.mrb[0].mxu0 %v1829
      %v1893 = vpop.f32.mrb[0].mxu0
      %v1894 = vadd.f32 %v397, %v1893
      %v1895 = vpop.f32.mrb[0].mxu0
      %v1896 = vadd.f32 %v401, %v1895
      %v1897 = vpop.f32.mrb[0].mxu0
      %v1898 = vadd.f32 %v397, %v1897
      %v1899 = vpop.f32.mrb[0].mxu0
      %v1900 = vadd.f32 %v401, %v1899
      %1901 = vmatprep.mubr.bf16.mxu0 0
      %1902 = vmatmul.mubr.bf16.gmra.mrb[0].mxu0 %v1830
      %v1903 = vpop.f32.mrb[0].mxu0
      %v1904 = vadd.f32 %v397, %v1903
      %v1905 = vpop.f32.mrb[0].mxu0
      %v1906 = vadd.f32 %v401, %v1905
      %v1907 = vpop.f32.mrb[0].mxu0
      %v1908 = vadd.f32 %v397, %v1907
      %v1909 = vpop.f32.mrb[0].mxu0
      %v1910 = vadd.f32 %v401, %v1909
      %1911 = vmatprep.mubr.bf16.mxu0 0
      %1912 = vmatmul.mubr.bf16.gmra.mrb[0].mxu0 %v1831
      %v1913 = vpop.f32.mrb[0].mxu0
      %v1914 = vadd.f32 %v397, %v1913
      %v1915 = vpop.f32.mrb[0].mxu0
      %v1916 = vadd.f32 %v401, %v1915
      %v1917 = vpop.f32.mrb[0].mxu0
      %v1918 = vadd.f32 %v397, %v1917
      %v1919 = vpop.f32.mrb[0].mxu0
      %v1920 = vadd.f32 %v401, %v1919
      %1921 = vmatprep.mubr.bf16.mxu0 0
      %1922 = vmatmul.mubr.bf16.gmra.mrb[0].mxu0 %v1832
      %v1923 = vpop.f32.mrb[0].mxu0
      %v1924 = vadd.f32 %v397, %v1923
      %v1925 = vpop.f32.mrb[0].mxu0
      %v1926 = vadd.f32 %v401, %v1925
      %v1927 = vpop.f32.mrb[0].mxu0
      %v1928 = vpop.f32.mrb[0].mxu0
      %1929 = vdwg.mxu0
      %v1930 = vmax.f32 %v1874, 0.0
      %v1931 = vmax.f32 %v1876, 0.0
      %v1932 = vmax.f32 %v1878, 0.0
      %v1933 = vmax.f32 %v1880, 0.0
      %v1934 = vmax.f32 %v1884, 0.0
      %v1935 = vmax.f32 %v1886, 0.0
      %v1936 = vmax.f32 %v1888, 0.0
      %v1937 = vmax.f32 %v1890, 0.0
      %v1938 = vmax.f32 %v1894, 0.0
      %v1939 = vmax.f32 %v1896, 0.0
      %v1940 = vmax.f32 %v1898, 0.0
      %v1941 = vmax.f32 %v1900, 0.0
      %v1942 = vmax.f32 %v1904, 0.0
      %v1943 = vmax.f32 %v1906, 0.0
      %v1944 = vmax.f32 %v1908, 0.0
      %v1945 = vmax.f32 %v1910, 0.0
      %v1946 = vmax.f32 %v1914, 0.0
      %v1947 = vmax.f32 %v1916, 0.0
      %v1948 = vmax.f32 %v1918, 0.0
      %v1949 = vmax.f32 %v1920, 0.0
      %v1950 = vmax.f32 %v1924, 0.0
      %v1951 = vmax.f32 %v1926, 0.0
      %v1952 = vmax.f32 %v1931, %v1939
      %v1953 = vmax.f32 %v1933, %v1941
      %v1954 = vmax.f32 %v1935, %v1943
      %v1955 = vmax.f32 %v1937, %v1945
      %v1956 = vmax.f32 %v1952, %v1947
      %v1957 = vmax.f32 %v1953, %v1949
      %v1958 = vsel %vm637, %v1951, -inf
      %v1959 = vmax.f32 %v1954, %v1958
      %v1960 = vmax.f32 %v1956, %v1957
      %v1961 = vmax.f32 %v1959, %v1955
      %v1962 = vmax.f32 %v1960, %v1961
      %v1963 = vrot.slane %v1962, 4
      %v1964 = vmax.f32 %v1962, %v1963
      %v1965 = vrot.slane %v1964, 2
      %v1966 = vmax.f32 %v1964, %v1965
      %v1967 = vrot.slane %v1966, 1
      %v1968 = vmax.f32 %v1966, %v1967
      %v1969 = vadd.f32 %v1931, %v1933
      %v1970 = vadd.f32 %v1969, %v1935
      %v1971 = vadd.f32 %v1970, %v1937
      %v1972 = vadd.f32 %v1971, %v1939
      %v1973 = vadd.f32 %v1972, %v1941
      %v1974 = vadd.f32 %v1973, %v1943
      %v1975 = vadd.f32 %v1974, %v1945
      %v1976 = vadd.f32 %v1975, %v1947
      %v1977 = vadd.f32 %v1976, %v1949
      %v1978 = vsel %vm637, %v1951, 0.0
      %v1979 = vadd.f32 %v1977, %v1978
      %v1980 = vrot.slane %v1979, 4
      %v1981 = vadd.f32 %v1979, %v1980
      %v1982 = vrot.slane %v1981, 2
      %v1983 = vadd.f32 %v1981, %v1982
      %v1984 = vrot.slane %v1983, 1
      %v1985 = vadd.f32 %v1983, %v1984
      %v1986 = vmul.f32 %v1985, %v666
      %v1987 = vpack.c.bf16 %v1968, %v1968
      %v1988 = vpack.c.bf16 %v1986, %v1986
      %1989 = vmatprep.subr.bf16.mxu0 0
      %1990 = vmatpush1.bf16.msra.mxu0 %v702
      %1991 = vmatprep.subr.bf16.mxu0 0
      %1992 = vmatpush1.bf16.msra.mxu0 %v703
      %1993 = vmatprep.subr.bf16.mxu0 0
      %1994 = vmatpush1.bf16.msra.mxu0 %v704
      %1995 = vmatprep.subr.bf16.mxu0 0
      %1996 = vmatpush1.bf16.msra.mxu0 %v705
      %1997 = vmatprep.subr.bf16.mxu0 0
      %1998 = vmatpush1.bf16.msra.mxu0 %v706
      %1999 = vmatprep.subr.bf16.mxu0 0
      %2000 = vmatpush1.bf16.msra.mxu0 %v707
      %2001 = vmatprep.subr.bf16.mxu0 0
      %2002 = vmatpush1.bf16.msra.mxu0 %v708
      %2003 = vmatprep.subr.bf16.mxu0 0
      %2004 = vmatpush1.bf16.msra.mxu0 %v709
      %2005 = vmatprep.subr.bf16.mxu0 0
      %2006 = vmatpush1.bf16.msra.mxu0 0
      %2007 = vmatprep.subr.bf16.mxu0 0
      %2008 = vmatpush1.bf16.msra.mxu0 0
      %2009 = vmatprep.subr.bf16.mxu0 0
      %2010 = vmatpush1.bf16.msra.mxu0 0
      %2011 = vmatprep.subr.bf16.mxu0 0
      %2012 = vmatpush1.bf16.msra.mxu0 0
      %2013 = vmatprep.subr.bf16.mxu0 0
      %2014 = vmatpush1.bf16.msra.mxu0 0
      %2015 = vmatprep.subr.bf16.mxu0 0
      %2016 = vmatpush1.bf16.msra.mxu0 0
      %2017 = vmatprep.subr.bf16.mxu0 0
      %2018 = vmatpush1.bf16.msra.mxu0 0
      %2019 = vmatprep.subr.bf16.mxu0 0
      %2020 = vmatpush1.bf16.msra.mxu0 0
      %2021 = vmatprep.mubr.bf16.mxu0 0
      %2022 = vmatmul.mubr.bf16.gmra.mrb[0].mxu0 %v1988
      %v2023 = vpop.f32.mrb[0].mxu0
      %v2024 = vadd.f32 0.0, %v2023
      %v2025 = vpop.f32.mrb[0].mxu0
      %v2026 = vpop.f32.mrb[0].mxu0
      %v2027 = vpop.f32.mrb[0].mxu0
      %2028 = vdwg.mxu0
      %2029 = vmatprep.subr.bf16.mxu0 0
      %2030 = vmatpush1.bf16.msra.mxu0 %v790
      %2031 = vmatprep.subr.bf16.mxu0 0
      %2032 = vmatpush1.bf16.msra.mxu0 %v791
      %2033 = vmatprep.subr.bf16.mxu0 0
      %2034 = vmatpush1.bf16.msra.mxu0 %v792
      %2035 = vmatprep.subr.bf16.mxu0 0
      %2036 = vmatpush1.bf16.msra.mxu0 %v793
      %2037 = vmatprep.subr.bf16.mxu0 0
      %2038 = vmatpush1.bf16.msra.mxu0 %v794
      %2039 = vmatprep.subr.bf16.mxu0 0
      %2040 = vmatpush1.bf16.msra.mxu0 %v795
      %2041 = vmatprep.subr.bf16.mxu0 0
      %2042 = vmatpush1.bf16.msra.mxu0 %v796
      %2043 = vmatprep.subr.bf16.mxu0 0
      %2044 = vmatpush1.bf16.msra.mxu0 %v797
      %2045 = vmatprep.subr.bf16.mxu0 0
      %2046 = vmatpush1.bf16.msra.mxu0 0
      %2047 = vmatprep.subr.bf16.mxu0 0
      %2048 = vmatpush1.bf16.msra.mxu0 0
      %2049 = vmatprep.subr.bf16.mxu0 0
      %2050 = vmatpush1.bf16.msra.mxu0 0
      %2051 = vmatprep.subr.bf16.mxu0 0
      %2052 = vmatpush1.bf16.msra.mxu0 0
      %2053 = vmatprep.subr.bf16.mxu0 0
      %2054 = vmatpush1.bf16.msra.mxu0 0
      %2055 = vmatprep.subr.bf16.mxu0 0
      %2056 = vmatpush1.bf16.msra.mxu0 0
      %2057 = vmatprep.subr.bf16.mxu0 0
      %2058 = vmatpush1.bf16.msra.mxu0 0
      %2059 = vmatprep.subr.bf16.mxu0 0
      %2060 = vmatpush1.bf16.msra.mxu0 0
      %2061 = vmatprep.mubr.bf16.mxu0 0
      %2062 = vmatmul.mubr.bf16.gmra.mrb[0].mxu0 %v1987
      %v2063 = vpop.f32.mrb[0].mxu0
      %v2064 = vadd.f32 %v2024, %v2063
      %v2065 = vpop.f32.mrb[0].mxu0
      %v2066 = vpop.f32.mrb[0].mxu0
      %v2067 = vpop.f32.mrb[0].mxu0
      %2068 = vdwg.mxu0
      %v2069 = vadd.f32 %v2064, %v364
      %v2070 = vlaneseq
      %v2071 = vshrl.u32 %v2070, 7
      %v2072 = vsub.s32 0, %v2071
      %v2073 = vrot.slane %v2069, %v2072
      %v2074 = vadd.f32 %v1930, %v2073
      %v2075 = vadd.f32 %v1932, %v2073
      %v2076 = vadd.f32 %v1934, %v2073
      %v2077 = vadd.f32 %v1936, %v2073
      %v2078 = vadd.f32 %v1938, %v2073
      %v2079 = vadd.f32 %v1940, %v2073
      %v2080 = vadd.f32 %v1942, %v2073
      %v2081 = vadd.f32 %v1944, %v2073
      %v2082 = vadd.f32 %v1946, %v2073
      %v2083 = vadd.f32 %v1948, %v2073
      %v2084 = vadd.f32 %v1950, %v2073
      %v2085 = vpack.c.bf16 %v2075, %v2074
      %v2086 = vpack.c.bf16 %v2077, %v2076
      %v2087 = vpack.c.bf16 %v2079, %v2078
      %v2088 = vpack.c.bf16 %v2081, %v2080
      %v2089 = vpack.c.bf16 %v2083, %v2082
      %v2090 = vpack.c.bf16 %v2084, %v2084
      %2091 = vmatprep.subr.bf16.mxu0 0
      %2092 = vmatpush1.bf16.msra.mxu0 %v906
      %2093 = vmatprep.subr.bf16.mxu0 0
      %2094 = vmatpush1.bf16.msra.mxu0 %v907
      %2095 = vmatprep.subr.bf16.mxu0 0
      %2096 = vmatpush1.bf16.msra.mxu0 %v908
      %2097 = vmatprep.subr.bf16.mxu0 0
      %2098 = vmatpush1.bf16.msra.mxu0 %v909
      %2099 = vmatprep.subr.bf16.mxu0 0
      %2100 = vmatpush1.bf16.msra.mxu0 %v910
      %2101 = vmatprep.subr.bf16.mxu0 0
      %2102 = vmatpush1.bf16.msra.mxu0 %v911
      %2103 = vmatprep.subr.bf16.mxu0 0
      %2104 = vmatpush1.bf16.msra.mxu0 %v912
      %2105 = vmatprep.subr.bf16.mxu0 0
      %2106 = vmatpush1.bf16.msra.mxu0 %v913
      %2107 = vmatprep.subr.bf16.mxu0 0
      %2108 = vmatpush1.bf16.msra.mxu0 0
      %2109 = vmatprep.subr.bf16.mxu0 0
      %2110 = vmatpush1.bf16.msra.mxu0 0
      %2111 = vmatprep.subr.bf16.mxu0 0
      %2112 = vmatpush1.bf16.msra.mxu0 0
      %2113 = vmatprep.subr.bf16.mxu0 0
      %2114 = vmatpush1.bf16.msra.mxu0 0
      %2115 = vmatprep.subr.bf16.mxu0 0
      %2116 = vmatpush1.bf16.msra.mxu0 0
      %2117 = vmatprep.subr.bf16.mxu0 0
      %2118 = vmatpush1.bf16.msra.mxu0 0
      %2119 = vmatprep.subr.bf16.mxu0 0
      %2120 = vmatpush1.bf16.msra.mxu0 0
      %2121 = vmatprep.subr.bf16.mxu0 0
      %2122 = vmatpush1.bf16.msra.mxu0 0
      %2123 = vmatprep.mubr.bf16.mxu0 0
      %2124 = vmatmul.mubr.bf16.gmra.mrb[0].mxu0 %v2085
      %v2125 = vpop.f32.mrb[0].mxu0
      %v2126 = vadd.f32 %v872, %v2125
      %v2127 = vpop.f32.mrb[0].mxu0
      %v2128 = vpop.f32.mrb[0].mxu0
      %v2129 = vadd.f32 %v872, %v2128
      %v2130 = vpop.f32.mrb[0].mxu0
      %2131 = vmatprep.mubr.bf16.mxu0 0
      %2132 = vmatmul.mubr.bf16.gmra.mrb[0].mxu0 %v2086
      %v2133 = vpop.f32.mrb[0].mxu0
      %v2134 = vadd.f32 %v872, %v2133
      %v2135 = vpop.f32.mrb[0].mxu0
      %v2136 = vpop.f32.mrb[0].mxu0
      %v2137 = vadd.f32 %v872, %v2136
      %v2138 = vpop.f32.mrb[0].mxu0
      %2139 = vmatprep.mubr.bf16.mxu0 0
      %2140 = vmatmul.mubr.bf16.gmra.mrb[0].mxu0 %v2087
      %v2141 = vpop.f32.mrb[0].mxu0
      %v2142 = vadd.f32 %v872, %v2141
      %v2143 = vpop.f32.mrb[0].mxu0
      %v2144 = vpop.f32.mrb[0].mxu0
      %v2145 = vadd.f32 %v872, %v2144
      %v2146 = vpop.f32.mrb[0].mxu0
      %2147 = vmatprep.mubr.bf16.mxu0 0
      %2148 = vmatmul.mubr.bf16.gmra.mrb[0].mxu0 %v2088
      %v2149 = vpop.f32.mrb[0].mxu0
      %v2150 = vadd.f32 %v872, %v2149
      %v2151 = vpop.f32.mrb[0].mxu0
      %v2152 = vpop.f32.mrb[0].mxu0
      %v2153 = vadd.f32 %v872, %v2152
      %v2154 = vpop.f32.mrb[0].mxu0
      %2155 = vmatprep.mubr.bf16.mxu0 0
      %2156 = vmatmul.mubr.bf16.gmra.mrb[0].mxu0 %v2089
      %v2157 = vpop.f32.mrb[0].mxu0
      %v2158 = vadd.f32 %v872, %v2157
      %v2159 = vpop.f32.mrb[0].mxu0
      %v2160 = vpop.f32.mrb[0].mxu0
      %v2161 = vadd.f32 %v872, %v2160
      %v2162 = vpop.f32.mrb[0].mxu0
      %2163 = vmatprep.mubr.bf16.mxu0 0
      %2164 = vmatmul.mubr.bf16.gmra.mrb[0].mxu0 %v2090
      %v2165 = vpop.f32.mrb[0].mxu0
      %v2166 = vadd.f32 %v872, %v2165
      %v2167 = vpop.f32.mrb[0].mxu0
      %v2168 = vpop.f32.mrb[0].mxu0
      %v2169 = vpop.f32.mrb[0].mxu0
      %2170 = vdwg.mxu0
      %s2171 = scalar_lea.vmem %s312, 264
      %2172 = vst [vmem:[%s2171] sm:$0xff] %v2126
      %2173 = vst [vmem:[%s2171 + $0x8] sm:$0xff] %v2129
      %2174 = vst [vmem:[%s2171 + $0x10] sm:$0xff] %v2134
      %2175 = vst [vmem:[%s2171 + $0x18] sm:$0xff] %v2137
      %2176 = vst [vmem:[%s2171 + $0x20] sm:$0xff] %v2142
      %2177 = vst [vmem:[%s2171 + $0x28] sm:$0xff] %v2145
      %2178 = vst [vmem:[%s2171 + $0x30] sm:$0xff] %v2150
      %2179 = vst [vmem:[%s2171 + $0x38] sm:$0xff] %v2153
      %2180 = vst [vmem:[%s2171 + $0x40] sm:$0xff] %v2158
      %2181 = vst [vmem:[%s2171 + $0x48] sm:$0xff] %v2161
      %2182 = vst [vmem:[%s2171 + $0x50] sm:$0x1] %v2166
      %s2183 = smul.u32 4, %s19
      %p2184 = scmp.lt.s32.totalorder %s2183, 7
      %s2185 = scalar_select %p2184, %s2183, 7
      %s2186 = smul.addr %s2185, 11
      %s2187 = smul.addr %s2186, 8
      %s2188 = scalar_lea.vmem %s8, %s2187
      // Predicated region
      $region53: #{tpu_custom_call.1} parent=51 // pred_check
        %p2189 = pneg %p210
      $region54: #{tpu_custom_call.1} parent=51 // pred_check_branch
        %2191 = sbr.rel (%p2189) target = $region56
      $region55: #{tpu_custom_call.1} parent=51 // pred_region
        %s2192 = smul.u32 4, %s19
      $region56: #{tpu_custom_call.1} parent=51 // pred_fallthru
        _
    $region52: #{tpu_custom_call.1} parent=5 // pred_fallthru
      _
    %p2193 = scmp.le.s32.totalorder 2, %s14
    // Predicated region
    $region57: #{tpu_custom_call.1} parent=5 // pred_check
      %p2194 = pneg %p2193
    $region58: #{tpu_custom_call.1} parent=5 // pred_check_branch
      %2196 = sbr.rel (%p2194) target = $region60
    $region59: #{tpu_custom_call.1} parent=5 // pred_region
      %s2197 = ssub.s32 %s14, 2
      // Predicated region
      $region61: #{tpu_custom_call.1} parent=59 // pred_check
        %p2198 = pneg %p216
      $region62: #{tpu_custom_call.1} parent=59 // pred_check_branch
        %2200 = sbr.rel (%p2198) target = $region64
      $region63: #{tpu_custom_call.1} parent=59 // pred_region
        %s2201 = smul.u32 4, %s20
        %p2202 = scmp.lt.s32.totalorder %s2201, 7
        %s2203 = scalar_select %p2202, %s2201, 7
        %s2204 = smul.addr %s2203, 11
        %s2205 = smul.addr %s2204, 8
        %s2206 = scalar_lea.vmem %s8, %s2205
      $region64: #{tpu_custom_call.1} parent=59 // pred_fallthru
        _
    $region60: #{tpu_custom_call.1} parent=5 // pred_fallthru
      _
  $region6: #{tpu_custom_call.1} parent=0 // loop_footer
    %s18 = sadd.s32 1, %s14
  $region7: #{tpu_custom_call.1} parent=0 // loop_footer_branch
    %13 = sbr.rel target = $region3
  $region8: #{tpu_custom_call.1} parent=0 // loop_exit
    _

</llo_original>
